<compile_context>
chip_gen: v7x
topology: tpu7x:2x2x1
jax: 0.10.0
libtpu: 0.0.40
codegen_flags: <defaults>
</compile_context>

<pallas_src>
import numpy as np
import jax
import jax.numpy as jnp
from jax import lax
from jax.experimental import pallas as pl
from jax.experimental.pallas import tpu as pltpu

# -------------------- small problem sizes (consistent with the module) ----------
M = 16        # number of Fourier modes (module's `m`)
D_MODEL = 32  # d_model (module uses 256; scaled down)
B = 2         # batch
L_SEQ = 8     # sequence length (derived from x.shape[-2] in the module)


# -------------------- constant (DFT / IDFT / selection) matrices -----------------
def _build_constants(seq_len, n_modes, d_model, dtype=jnp.float32):
    """Fold fft / reshape+view_as_complex / real(ifft) into constant matmul operands.

    Returns:
      C   : (2m, L)   rows [0:m] = cos DFT rows, rows [m:2m] = -sin DFT rows,
                      so C @ x == concat(Re(fft(x, n=m)), Im(fft(x, n=m))).
      Art : (2m, 2L)  transpose of Ar = [ICr @ P_even ; ICr @ P_odd]
      Ait : (2m, 2L)  transpose of Ai = [ICi @ P_even ; ICi @ P_odd]
      Sre : (D, D//2) selects even feature columns of y (real lanes after reshape)
      Sim : (D, D//2) selects odd  feature columns of y (imag lanes after reshape)

    With y = Kernel_Layer(C @ x) of shape (2m, D):
      out[:, :D//2] = (Ar @ y @ Sre + Ai @ y @ Sim)[:L]
      out[:, D//2:] = (Ar @ y @ Sre + Ai @ y @ Sim)[L:]
    which is exactly reshape -> view_as_complex -> real(ifft(., n=L)).
    """
    m, L, D = n_modes, seq_len, d_model
    assert D % 2 == 0, "d_model must be even (view_as_complex interleaving)"

    # Forward DFT rows: fft(x, n=m, dim=-2) truncates (L > m) / zero-pads (L < m).
    k = np.arange(m, dtype=np.float64)[:, None]
    l = np.arange(L, dtype=np.float64)[None, :]
    ang = 2.0 * np.pi * k * l / m
    keep = (l < m).astype(np.float64)
    cr = np.cos(ang) * keep                               # (m, L)
    ci = -np.sin(ang) * keep                              # (m, L)
    C = np.concatenate([cr, ci], axis=0)                  # (2m, L)

    # real(ifft(z, n=L, dim=-2)): truncates modes (m > L) / zero-pads (m < L), 1/L scale.
    ll = np.arange(L, dtype=np.float64)[:, None]
    kk = np.arange(m, dtype=np.float64)[None, :]
    ang2 = 2.0 * np.pi * kk * ll / L
    keep2 = (kk < L).astype(np.float64)
    icr = np.cos(ang2) * keep2 / L                        # (L, m)
    ici = -np.sin(ang2) * keep2 / L                       # (L, m)

    # Row interleaving of the torch.reshape((B, m, D, 2)):
    #   z[:, d'<D/2]  comes from EVEN rows of y, z[:, d'>=D/2] from ODD rows.
    p_even = np.zeros((m, 2 * m))
    p_even[np.arange(m), 2 * np.arange(m)] = 1.0
    p_odd = np.zeros((m, 2 * m))
    p_odd[np.arange(m), 2 * np.arange(m) + 1] = 1.0
    Ar = np.concatenate([icr @ p_even, icr @ p_odd], axis=0)   # (2L, 2m)
    Ai = np.concatenate([ici @ p_even, ici @ p_odd], axis=0)   # (2L, 2m)

    # Column interleaving: real part = even columns of y, imag part = odd columns.
    Sre = np.zeros((D, D // 2))
    Sre[2 * np.arange(D // 2), np.arange(D // 2)] = 1.0
    Sim = np.zeros((D, D // 2))
    Sim[2 * np.arange(D // 2) + 1, np.arange(D // 2)] = 1.0

    return (jnp.asarray(C, dtype),
            jnp.asarray(Ar.T, dtype),   # (2m, 2L): mode axis leading so it can be tiled
            jnp.asarray(Ai.T, dtype),
            jnp.asarray(Sre, dtype),
            jnp.asarray(Sim, dtype))


# -------------------- fused Pallas kernel ----------------------------------------
def _feb_f_kernel(x_ref, c_ref, w_ref, sre_ref, sim_ref, art_ref, ait_ref,
                  o_ref, acc_ref):
    """Grid = (batch, mode_blocks). Accumulates the IDFT over mode blocks.

    x_ref  : (1, L, D)            input block (one batch element)
    c_ref  : (tk, L)              stacked DFT rows for this mode block
    w_ref  : (tk, D, D)           Kernel_Layer weights for this mode block (un-transposed)
    sre/sim: (D, D/2)             even / odd column selectors
    art/ait: (tk, 2L)             (IDFT ∘ row-interleave) matrices, mode axis leading
    o_ref  : (1, L, D)            output block (resident across the mode-block axis)
    acc_ref: (2L, D/2) f32 VMEM   accumulator (rows [0:L] -> out[:, :D/2], [L:2L] -> out[:, D/2:])
    """
    g = pl.program_id(1)

    @pl.when(g == 0)
    def _init():
        acc_ref[...] = jnp.zeros_like(acc_ref)

    x = x_ref[0]                                                         # (L, D)

    # DFT rows for this mode block (covers real AND imag rows of concat(Re, Im)).
    xcat = jnp.dot(c_ref[...], x, preferred_element_type=jnp.float32)    # (tk, D)

    # Kernel_Layer: y[k, :] = xcat[k, :] @ W[k]  -> batched MXU contraction over modes,
    # contracting W's d_in axis directly (no wrapper-side weight transpose).
    y = lax.dot_general(
        xcat[:, None, :], w_ref[...],
        dimension_numbers=(((2,), (1,)), ((0,), (0,))),
        preferred_element_type=jnp.float32)                              # (tk, 1, D)
    y = y[:, 0, :]                                                       # (tk, D)

    # reshape + view_as_complex + real(ifft(., n=L)) as MXU matmuls.
    ys_re = jnp.dot(y, sre_ref[...], preferred_element_type=jnp.float32)  # (tk, D/2)
    ys_im = jnp.dot(y, sim_ref[...], preferred_element_type=jnp.float32)  # (tk, D/2)
    acc_ref[...] += (
        lax.dot_general(art_ref[...], ys_re,
                        dimension_numbers=(((0,), (0,)), ((), ())),
                        preferred_element_type=jnp.float32)
        + lax.dot_general(ait_ref[...], ys_im,
                          dimension_numbers=(((0,), (0,)), ((), ())),
                          preferred_element_type=jnp.float32))           # (2L, D/2)

    @pl.when(g == pl.num_programs(1) - 1)
    def _finalize():
        seq = o_ref.shape[1]
        acc = acc_ref[...]
        o_ref[0] = jnp.concatenate([acc[:seq], acc[seq:]], axis=-1).astype(o_ref.dtype)


# -------------------- wrapper ------------------------------------------------------
def feb_f_forward(x, weights, *, mode_block=None):
    """x: (B, L, D) float32; weights: (2m, D_in, D_out) float32 (Kernel_Layer weights)."""
    batch, seq_len, d = x.shape
    two_m = weights.shape[0]
    m = two_m // 2
    assert weights.shape == (two_m, d, d), weights.shape
    assert d % 2 == 0

    if mode_block is None:
        # Keep the resident weight slab modest (important at production 2m=512, D=256,
        # esp. on v7x's 64 MiB VMEM); at tiny test sizes any divisor is fine.
        mode_block = next(c for c in (64, 32, 16, 8, 4, 2, 1) if two_m % c == 0)
    assert two_m % mode_block == 0
    assert mode_block % 8 == 0 or mode_block == two_m
    n_blocks = two_m // mode_block

    C, Art, Ait, Sre, Sim = _build_constants(seq_len, m, d, x.dtype)
    half = d // 2
    two_l = 2 * seq_len

    return pl.pallas_call(
        _feb_f_kernel,
        out_shape=jax.ShapeDtypeStruct((batch, seq_len, d), x.dtype),
        grid_spec=pltpu.PrefetchScalarGridSpec(
            num_scalar_prefetch=0,
            grid=(batch, n_blocks),
            in_specs=[
                pl.BlockSpec((1, seq_len, d), lambda b, g: (b, 0, 0)),      # x
                pl.BlockSpec((mode_block, seq_len), lambda b, g: (g, 0)),   # C (DFT rows)
                pl.BlockSpec((mode_block, d, d), lambda b, g: (g, 0, 0)),   # weights
                pl.BlockSpec((d, half), lambda b, g: (0, 0)),               # Sre
                pl.BlockSpec((d, half), lambda b, g: (0, 0)),               # Sim
                pl.BlockSpec((mode_block, two_l), lambda b, g: (g, 0)),     # Art
                pl.BlockSpec((mode_block, two_l), lambda b, g: (g, 0)),     # Ait
            ],
            out_specs=pl.BlockSpec((1, seq_len, d), lambda b, g: (b, 0, 0)),
            scratch_shapes=[pltpu.VMEM((two_l, half), jnp.float32)],
        ),
        compiler_params=pltpu.CompilerParams(
            # batch axis shards across TensorCores (v7x); mode-block axis is a reduction.
            dimension_semantics=("parallel", "arbitrary"),
            # headroom for larger (production) mode-tiled weight blocks + double buffering.
            vmem_limit_bytes=48 * 1024 * 1024,
        ),
    )(x, C, weights, Sre, Sim, Art, Ait)


# -------------------- pure-JAX reference (mirrors the PyTorch forward) -------------
def ref_forward(x, weights, m):
    seq_len = x.shape[-2]
    xf = jnp.fft.fft(x, n=m, axis=-2)                                     # (B, m, D) complex
    xc = jnp.concatenate([jnp.real(xf), jnp.imag(xf)], axis=-2)           # (B, 2m, D)
    y = jnp.einsum('bkd,kde->bke', xc, weights,
                   precision=lax.Precision.HIGHEST)                       # Kernel_Layer
    y = jnp.reshape(y, (y.shape[-3], y.shape[-2] // 2, y.shape[-1], 2))
    z = y[..., 0] + 1j * y[..., 1]
    return jnp.real(jnp.fft.ifft(z, n=seq_len, axis=-2))


# -------------------- main ----------------------------------------------------------
if __name__ == "__main__":
    key = jax.random.PRNGKey(0)
    kx, kw = jax.random.split(key)
    x = jax.random.normal(kx, (B, L_SEQ, D_MODEL), dtype=jnp.float32)
    # Kernel_Layer(m=2*M, d_in=D_MODEL, d_out=D_MODEL): weights ~ N(0,1)
    weights = jax.random.normal(kw, (2 * M, D_MODEL, D_MODEL), dtype=jnp.float32)

    # mode_block=16 -> 2 mode blocks, exercising the reduction/accumulation path.
    out = feb_f_forward(x, weights, mode_block=16)
    out = jax.block_until_ready(out)

    ref = ref_forward(x, weights, M)
    assert out.shape == (B, L_SEQ, D_MODEL), out.shape
    max_err = float(jnp.max(jnp.abs(out - ref)))
    if not jnp.allclose(out, ref, atol=1e-3, rtol=1e-3):
        raise AssertionError(f"Pallas output mismatch vs reference, max abs err = {max_err}")
    print("KERNEL_OK")
</pallas_src>

<mosaic_0001>
module attributes {stable_mosaic.version = 11 : i64} {
  func.func @_feb_f_kernel(%arg0: i32, %arg1: i32, %arg2: memref<1x8x32xf32, #tpu.memory_space<vmem>>, %arg3: memref<16x8xf32, #tpu.memory_space<vmem>>, %arg4: memref<16x32x32xf32, #tpu.memory_space<vmem>>, %arg5: memref<32x16xf32, #tpu.memory_space<vmem>>, %arg6: memref<32x16xf32, #tpu.memory_space<vmem>>, %arg7: memref<16x16xf32, #tpu.memory_space<vmem>>, %arg8: memref<16x16xf32, #tpu.memory_space<vmem>>, %arg9: memref<1x8x32xf32, #tpu.memory_space<vmem>>, %arg10: memref<16x16xf32, #tpu.memory_space<vmem>>) attributes {dimension_semantics = [#tpu.dimension_semantics<parallel>, #tpu.dimension_semantics<arbitrary>], iteration_bounds = array<i64: 2, 2>, scalar_prefetch = 0 : i64, scratch_operands = 1 : i64, tpu.core_type = #tpu.core_type<tc>, window_params = [{transform_indices = @transform_0, window_bounds = array<i64: 1, 8, 32>}, {transform_indices = @transform_1, window_bounds = array<i64: 16, 8>}, {transform_indices = @transform_2, window_bounds = array<i64: 16, 32, 32>}, {pipeline_mode = #tpu.pipeline_mode<synchronous>, transform_indices = @transform_3, window_bounds = array<i64: 32, 16>}, {pipeline_mode = #tpu.pipeline_mode<synchronous>, transform_indices = @transform_4, window_bounds = array<i64: 32, 16>}, {transform_indices = @transform_5, window_bounds = array<i64: 16, 16>}, {transform_indices = @transform_6, window_bounds = array<i64: 16, 16>}, {transform_indices = @transform_7, window_bounds = array<i64: 1, 8, 32>}]} {
    %c0_i32 = arith.constant 0 : i32
    %0 = arith.cmpi eq, %arg1, %c0_i32 : i32
    %1 = arith.extui %0 : i1 to i32
    %c0_i32_0 = arith.constant 0 : i32
    %2 = arith.cmpi ne, %1, %c0_i32_0 : i32
    scf.if %2 {
      %cst_26 = arith.constant 0.000000e+00 : f32
      %26 = vector.broadcast %cst_26 : f32 to vector<16x16xf32>
      %c0_27 = arith.constant 0 : index
      %c0_28 = arith.constant 0 : index
      %27 = vector.load %arg10[%c0_27, %c0_28] : memref<16x16xf32, #tpu.memory_space<vmem>>, vector<16x16xf32>
      tpu.vector_store %arg10[%c0_27, %c0_28], %26 {strides = array<i32>} : memref<16x16xf32, #tpu.memory_space<vmem>>, vector<16x16xf32>,
    } else {
    }
    %c0 = arith.constant 0 : index
    %c0_1 = arith.constant 0 : index
    %c0_2 = arith.constant 0 : index
    %3 = vector.load %arg2[%c0, %c0_1, %c0_2] : memref<1x8x32xf32, #tpu.memory_space<vmem>>, vector<1x8x32xf32>
    %4 = vector.shape_cast %3 : vector<1x8x32xf32> to vector<8x32xf32>
    %c0_3 = arith.constant 0 : index
    %c0_4 = arith.constant 0 : index
    %5 = vector.load %arg3[%c0_3, %c0_4] : memref<16x8xf32, #tpu.memory_space<vmem>>, vector<16x8xf32>
    %cst = arith.constant dense<0.000000e+00> : vector<16x32xf32>
    %6 = tpu.matmul %5, %4, %cst {dimension_numbers = #tpu.dot_dimension_numbers<[1], [0], [0], [1], [0, 0, 1, 1], [], []>} : vector<16x8xf32>, vector<8x32xf32>, vector<16x32xf32> -> vector<16x32xf32>
    %7 = vector.shape_cast %6 : vector<16x32xf32> to vector<16x1x32xf32>
    %c0_5 = arith.constant 0 : index
    %c0_6 = arith.constant 0 : index
    %c0_7 = arith.constant 0 : index
    %8 = vector.load %arg4[%c0_5, %c0_6, %c0_7] : memref<16x32x32xf32, #tpu.memory_space<vmem>>, vector<16x32x32xf32>
    %cst_8 = arith.constant dense<0.000000e+00> : vector<16x1x32xf32>
    %9 = tpu.matmul %7, %8, %cst_8 {dimension_numbers = #tpu.dot_dimension_numbers<[2], [1], [1], [2], [0, 0, 0, 1, 1, 2], [0], [0]>} : vector<16x1x32xf32>, vector<16x32x32xf32>, vector<16x1x32xf32> -> vector<16x1x32xf32>
    %10 = vector.shape_cast %9 : vector<16x1x32xf32> to vector<16x32xf32>
    %c0_9 = arith.constant 0 : index
    %c0_10 = arith.constant 0 : index
    %11 = vector.load %arg5[%c0_9, %c0_10] : memref<32x16xf32, #tpu.memory_space<vmem>>, vector<32x16xf32>
    %cst_11 = arith.constant dense<0.000000e+00> : vector<16x16xf32>
    %12 = tpu.matmul %10, %11, %cst_11 {dimension_numbers = #tpu.dot_dimension_numbers<[1], [0], [0], [1], [0, 0, 1, 1], [], []>} : vector<16x32xf32>, vector<32x16xf32>, vector<16x16xf32> -> vector<16x16xf32>
    %c0_12 = arith.constant 0 : index
    %c0_13 = arith.constant 0 : index
    %13 = vector.load %arg6[%c0_12, %c0_13] : memref<32x16xf32, #tpu.memory_space<vmem>>, vector<32x16xf32>
    %cst_14 = arith.constant dense<0.000000e+00> : vector<16x16xf32>
    %14 = tpu.matmul %10, %13, %cst_14 {dimension_numbers = #tpu.dot_dimension_numbers<[1], [0], [0], [1], [0, 0, 1, 1], [], []>} : vector<16x32xf32>, vector<32x16xf32>, vector<16x16xf32> -> vector<16x16xf32>
    %c0_15 = arith.constant 0 : index
    %c0_16 = arith.constant 0 : index
    %15 = vector.load %arg10[%c0_15, %c0_16] : memref<16x16xf32, #tpu.memory_space<vmem>>, vector<16x16xf32>
    %c0_17 = arith.constant 0 : index
    %c0_18 = arith.constant 0 : index
    %16 = vector.load %arg7[%c0_17, %c0_18] : memref<16x16xf32, #tpu.memory_space<vmem>>, vector<16x16xf32>
    %cst_19 = arith.constant dense<0.000000e+00> : vector<16x16xf32>
    %17 = tpu.matmul %16, %12, %cst_19 {dimension_numbers = #tpu.dot_dimension_numbers<[0], [0], [1], [1], [0, 1, 1, 1], [], []>} : vector<16x16xf32>, vector<16x16xf32>, vector<16x16xf32> -> vector<16x16xf32>
    %c0_20 = arith.constant 0 : index
    %c0_21 = arith.constant 0 : index
    %18 = vector.load %arg8[%c0_20, %c0_21] : memref<16x16xf32, #tpu.memory_space<vmem>>, vector<16x16xf32>
    %cst_22 = arith.constant dense<0.000000e+00> : vector<16x16xf32>
    %19 = tpu.matmul %18, %14, %cst_22 {dimension_numbers = #tpu.dot_dimension_numbers<[0], [0], [1], [1], [0, 1, 1, 1], [], []>} : vector<16x16xf32>, vector<16x16xf32>, vector<16x16xf32> -> vector<16x16xf32>
    %20 = arith.addf %17, %19 : vector<16x16xf32>
    %21 = arith.addf %15, %20 : vector<16x16xf32>
    %c0_23 = arith.constant 0 : index
    %c0_24 = arith.constant 0 : index
    %22 = vector.load %arg10[%c0_23, %c0_24] : memref<16x16xf32, #tpu.memory_space<vmem>>, vector<16x16xf32>
    tpu.vector_store %arg10[%c0_23, %c0_24], %21 {strides = array<i32>} : memref<16x16xf32, #tpu.memory_space<vmem>>, vector<16x16xf32>,
    %c1_i32 = arith.constant 1 : i32
    %23 = arith.cmpi eq, %arg1, %c1_i32 : i32
    %24 = arith.extui %23 : i1 to i32
    %c0_i32_25 = arith.constant 0 : i32
    %25 = arith.cmpi ne, %24, %c0_i32_25 : i32
    scf.if %25 {
      %c0_26 = arith.constant 0 : index
      %c0_27 = arith.constant 0 : index
      %26 = vector.load %arg10[%c0_26, %c0_27] : memref<16x16xf32, #tpu.memory_space<vmem>>, vector<16x16xf32>
      %27 = vector.extract_strided_slice %26 {offsets = [0, 0], sizes = [8, 16], strides = [1, 1]} : vector<16x16xf32> to vector<8x16xf32>
      %28 = vector.extract_strided_slice %26 {offsets = [8, 0], sizes = [8, 16], strides = [1, 1]} : vector<16x16xf32> to vector<8x16xf32>
      %29 = tpu.concatenate %27, %28 in 1 : vector<8x16xf32>, vector<8x16xf32> -> vector<8x32xf32>
      %c0_28 = arith.constant 0 : index
      %c0_29 = arith.constant 0 : index
      %c0_30 = arith.constant 0 : index
      %30 = vector.load %arg9[%c0_28, %c0_29, %c0_30] : memref<1x8x32xf32, #tpu.memory_space<vmem>>, vector<1x8x32xf32>
      %31 = vector.shape_cast %30 : vector<1x8x32xf32> to vector<8x32xf32>
      %32 = vector.shape_cast %29 : vector<8x32xf32> to vector<1x8x32xf32>
      tpu.vector_store %arg9[%c0_28, %c0_29, %c0_30], %32 {strides = array<i32>} : memref<1x8x32xf32, #tpu.memory_space<vmem>>, vector<1x8x32xf32>,
    } else {
    }
    return
  }
  func.func @transform_0(%arg0: i32, %arg1: i32) -> (i32, i32, i32) {
    %c0_i32 = arith.constant 0 : i32
    %c0_i32_0 = arith.constant 0 : i32
    %c0_i32_1 = arith.constant 0 : i32
    return %arg0, %c0_i32, %c0_i32_0 : i32, i32, i32
  }
  func.func @transform_1(%arg0: i32, %arg1: i32) -> (i32, i32) {
    %c0_i32 = arith.constant 0 : i32
    %c0_i32_0 = arith.constant 0 : i32
    return %arg1, %c0_i32 : i32, i32
  }
  func.func @transform_2(%arg0: i32, %arg1: i32) -> (i32, i32, i32) {
    %c0_i32 = arith.constant 0 : i32
    %c0_i32_0 = arith.constant 0 : i32
    %c0_i32_1 = arith.constant 0 : i32
    return %arg1, %c0_i32, %c0_i32_0 : i32, i32, i32
  }
  func.func @transform_3(%arg0: i32, %arg1: i32) -> (i32, i32) {
    %c0_i32 = arith.constant 0 : i32
    %c0_i32_0 = arith.constant 0 : i32
    %c0_i32_1 = arith.constant 0 : i32
    return %c0_i32, %c0_i32_0 : i32, i32
  }
  func.func @transform_4(%arg0: i32, %arg1: i32) -> (i32, i32) {
    %c0_i32 = arith.constant 0 : i32
    %c0_i32_0 = arith.constant 0 : i32
    %c0_i32_1 = arith.constant 0 : i32
    return %c0_i32, %c0_i32_0 : i32, i32
  }
  func.func @transform_5(%arg0: i32, %arg1: i32) -> (i32, i32) {
    %c0_i32 = arith.constant 0 : i32
    %c0_i32_0 = arith.constant 0 : i32
    return %arg1, %c0_i32 : i32, i32
  }
  func.func @transform_6(%arg0: i32, %arg1: i32) -> (i32, i32) {
    %c0_i32 = arith.constant 0 : i32
    %c0_i32_0 = arith.constant 0 : i32
    return %arg1, %c0_i32 : i32, i32
  }
  func.func @transform_7(%arg0: i32, %arg1: i32) -> (i32, i32, i32) {
    %c0_i32 = arith.constant 0 : i32
    %c0_i32_0 = arith.constant 0 : i32
    %c0_i32_1 = arith.constant 0 : i32
    return %arg0, %c0_i32, %c0_i32_0 : i32, i32, i32
  }
}

</mosaic_0001>

<llo_original>
// kernel: tpu_custom_call.1
$region0: #{tpu_custom_call.1}
  #allocation0 [shape = 'u32[]', space=smem, size = 0x4, offset = 0x4, fixed_abs, tag = 'smem constant byte address 0x4 - core index']
  #allocation1 [shape = 'u32[144,128]{1,0:T(1,128)}', space=vmem, size = 0x12000, scoped, tag = 'internal scratch']
  #allocation2 [shape = 'f32[16,16]{1,0:T(8,128)}', space=vmem, size = 0x2000, scoped, tag = 'scratch operand']
  %s0 = inlined_call_operand.vmem [shape: f32[2,8,32], index: 0, kind: input, shape index: {}]
  %s1 = inlined_call_operand.vmem [shape: f32[32,8], index: 1, kind: input, shape index: {}]
  %s2 = inlined_call_operand.hbm [shape: f32[32,32,32], index: 2, kind: input, shape index: {}]
  %s3 = inlined_call_operand.vmem [shape: f32[32,16], index: 3, kind: input, shape index: {}]
  %s4 = inlined_call_operand.vmem [shape: f32[32,16], index: 4, kind: input, shape index: {}]
  %s5 = inlined_call_operand.vmem [shape: f32[32,16], index: 5, kind: input, shape index: {}]
  %s6 = inlined_call_operand.vmem [shape: f32[32,16], index: 6, kind: input, shape index: {}]
  %s7 = inlined_call_operand.hbm [shape: f32[2,8,32], index: 7, kind: output, shape index: {}]
  %s8 = sld [smem:[#allocation0]]
  $region73: #{tpu_custom_call.1} parent=0
    _
  %s10 = ssub.s32 1, %s8
  %s11 = scalar_select 0, %s10, %s8
  $region1: #{tpu_custom_call.1} parent=0
    #allocation3 [shape = 'u8[524288]{0}', space=vmem, size = 0x80000, scoped, tag = 'input window, operand 2']
    #allocation4 [shape = 's32[2]{0}', space=sflag, size = 0x8, scoped, tag = 'scoped memory for tpu_custom_call.1']
    #allocation5 [shape = 's32[2]{0}', space=sflag, size = 0x8, scoped, tag = 'scoped memory for tpu_custom_call.1']
    #allocation6 [shape = 'u8[8192]{0}', space=vmem, size = 0x2000, scoped, tag = 'output window, operand 0']
    %12 = vsyncpa [#allocation4], 0
    %s13 = scalar_lea.sflag [#allocation4], 1
    %14 = vsyncpa %s13, 0
    %15 = vsyncpa [#allocation5], 0
    %s16 = scalar_lea.sflag [#allocation5], 1
    %17 = vsyncpa %s16, 0
    loop: start=0, step=1, limit=6
    $region2: #{tpu_custom_call.1} parent=1 // loop_pre_header
      _
    $region3: #{tpu_custom_call.1} parent=1 // loop_header
      %s19 = sphi 0, %s23
      %p20 = scmp.ge.s32.totalorder %s19, 6
      %s26 = sphi 0, %s38
      %s27 = sphi 0, %s34
      %s28 = sphi 0, %s26
      %s29 = sphi 0, %s27
      %s30 = sphi 0, %s28
      %s31 = sphi 0, %s29
      %s41 = sphi 0, %s43
      %s44 = sphi 0, %s41
      %s45 = sphi 0, %s44
      %s61 = sphi 0, %s45
      %s67 = sphi 0, %s69
      %s70 = sphi 0, %s67
      %s71 = sphi 0, %s70
      %s87 = sphi 0, %s71
      %s93 = sphi 0, %s95
      %s96 = sphi 0, %s93
      %s97 = sphi 0, %s96
      %s113 = sphi 0, %s97
      %s117 = sphi 0, %s117
      %s119 = sphi 0, %s117
      %s120 = sphi 0, %s119
      %s134 = sphi 0, %s120
      %s138 = sphi 0, %s138
      %s140 = sphi 0, %s138
      %s141 = sphi 0, %s140
      %s155 = sphi 0, %s141
      %s161 = sphi 0, %s163
      %s164 = sphi 0, %s161
      %s165 = sphi 0, %s164
      %s181 = sphi 0, %s165
      %s187 = sphi 0, %s189
      %s190 = sphi 0, %s187
      %s191 = sphi 0, %s190
      %s207 = sphi 0, %s191
      %s213 = sphi 0, %s215
      %s216 = sphi 0, %s213
      %s217 = sphi 0, %s216
      %s233 = sphi 0, %s217
    $region4: #{tpu_custom_call.1} parent=1 // loop_header_branch
      %22 = sbr.rel (%p20) target = $region8
    $region5: #{tpu_custom_call.1} parent=1 // loop_body
      %s24 = ssub.s32 %s19, 1
      %s25 = ssub.s32 %s19, 2
      %s32 = sadd.s32 1, %s27
      %p33 = scmp.ge.s32.totalorder %s32, 2
      %s34 = scalar_select %p33, 0, %s32
      %s35 = sadd.s32 1, %s26
      %s36 = scalar_select %p33, %s35, %s26
      %p37 = scmp.ge.s32.totalorder %s36, 2
      %s38 = scalar_select %p37, 0, %s36
      %s39 = ssub.s32 %s26, %s38
      %p40 = scmp.eq.s32.totalorder %s39, 0
      %s42 = sadd.s32 %s41, 1
      %s43 = scalar_select %p40, %s41, %s42
      %p46 = pneg %p40
      %p47 = scmp.eq.s32.totalorder %s19, 3
      %p48 = por %p46, %p47
      %p49 = scmp.ne.s32.totalorder %s41, %s44
      %p50 = scmp.eq.s32.totalorder %s19, 0
      %p51 = por %p49, %p50
      %p52 = scmp.ne.s32.totalorder %s41, %s44
      %p53 = scmp.eq.s32.totalorder %s24, 3
      %p54 = por %p52, %p53
      %p55 = scmp.ne.s32.totalorder %s44, %s45
      %p56 = scmp.eq.s32.totalorder %s24, 0
      %p57 = por %p55, %p56
      %p58 = scmp.ne.s32.totalorder %s44, %s45
      %p59 = scmp.eq.s32.totalorder %s25, 3
      %p60 = por %p58, %p59
      %p62 = scmp.ne.s32.totalorder %s45, %s61
      %p63 = scmp.eq.s32.totalorder %s25, 0
      %p64 = por %p62, %p63
      %s65 = ssub.s32 %s27, %s34
      %p66 = scmp.eq.s32.totalorder %s65, 0
      %s68 = sadd.s32 %s67, 1
      %s69 = scalar_select %p66, %s67, %s68
      %p72 = pneg %p66
      %p73 = scmp.eq.s32.totalorder %s19, 3
      %p74 = por %p72, %p73
      %p75 = scmp.ne.s32.totalorder %s67, %s70
      %p76 = scmp.eq.s32.totalorder %s19, 0
      %p77 = por %p75, %p76
      %p78 = scmp.ne.s32.totalorder %s67, %s70
      %p79 = scmp.eq.s32.totalorder %s24, 3
      %p80 = por %p78, %p79
      %p81 = scmp.ne.s32.totalorder %s70, %s71
      %p82 = scmp.eq.s32.totalorder %s24, 0
      %p83 = por %p81, %p82
      %p84 = scmp.ne.s32.totalorder %s70, %s71
      %p85 = scmp.eq.s32.totalorder %s25, 3
      %p86 = por %p84, %p85
      %p88 = scmp.ne.s32.totalorder %s71, %s87
      %p89 = scmp.eq.s32.totalorder %s25, 0
      %p90 = por %p88, %p89
      %s91 = ssub.s32 %s27, %s34
      %p92 = scmp.eq.s32.totalorder %s91, 0
      %s94 = sadd.s32 %s93, 1
      %s95 = scalar_select %p92, %s93, %s94
      %p98 = pneg %p92
      %p99 = scmp.eq.s32.totalorder %s19, 3
      %p100 = por %p98, %p99
      %p101 = scmp.ne.s32.totalorder %s93, %s96
      %p102 = scmp.eq.s32.totalorder %s19, 0
      %p103 = por %p101, %p102
      %p104 = scmp.ne.s32.totalorder %s93, %s96
      %p105 = scmp.eq.s32.totalorder %s24, 3
      %p106 = por %p104, %p105
      %p107 = scmp.ne.s32.totalorder %s96, %s97
      %p108 = scmp.eq.s32.totalorder %s24, 0
      %p109 = por %p107, %p108
      %p110 = scmp.ne.s32.totalorder %s96, %s97
      %p111 = scmp.eq.s32.totalorder %s25, 3
      %p112 = por %p110, %p111
      %p114 = scmp.ne.s32.totalorder %s97, %s113
      %p115 = scmp.eq.s32.totalorder %s25, 0
      %p116 = por %p114, %p115
      %s118 = sadd.s32 %s117, 1
      %p121 = scmp.eq.s32.totalorder %s19, 3
      %p122 = scmp.ne.s32.totalorder %s117, %s119
      %p123 = scmp.eq.s32.totalorder %s19, 0
      %p124 = por %p122, %p123
      %p125 = scmp.ne.s32.totalorder %s117, %s119
      %p126 = scmp.eq.s32.totalorder %s24, 3
      %p127 = por %p125, %p126
      %p128 = scmp.ne.s32.totalorder %s119, %s120
      %p129 = scmp.eq.s32.totalorder %s24, 0
      %p130 = por %p128, %p129
      %p131 = scmp.ne.s32.totalorder %s119, %s120
      %p132 = scmp.eq.s32.totalorder %s25, 3
      %p133 = por %p131, %p132
      %p135 = scmp.ne.s32.totalorder %s120, %s134
      %p136 = scmp.eq.s32.totalorder %s25, 0
      %p137 = por %p135, %p136
      %s139 = sadd.s32 %s138, 1
      %p142 = scmp.eq.s32.totalorder %s19, 3
      %p143 = scmp.ne.s32.totalorder %s138, %s140
      %p144 = scmp.eq.s32.totalorder %s19, 0
      %p145 = por %p143, %p144
      %p146 = scmp.ne.s32.totalorder %s138, %s140
      %p147 = scmp.eq.s32.totalorder %s24, 3
      %p148 = por %p146, %p147
      %p149 = scmp.ne.s32.totalorder %s140, %s141
      %p150 = scmp.eq.s32.totalorder %s24, 0
      %p151 = por %p149, %p150
      %p152 = scmp.ne.s32.totalorder %s140, %s141
      %p153 = scmp.eq.s32.totalorder %s25, 3
      %p154 = por %p152, %p153
      %p156 = scmp.ne.s32.totalorder %s141, %s155
      %p157 = scmp.eq.s32.totalorder %s25, 0
      %p158 = por %p156, %p157
      %s159 = ssub.s32 %s27, %s34
      %p160 = scmp.eq.s32.totalorder %s159, 0
      %s162 = sadd.s32 %s161, 1
      %s163 = scalar_select %p160, %s161, %s162
      %p166 = pneg %p160
      %p167 = scmp.eq.s32.totalorder %s19, 3
      %p168 = por %p166, %p167
      %p169 = scmp.ne.s32.totalorder %s161, %s164
      %p170 = scmp.eq.s32.totalorder %s19, 0
      %p171 = por %p169, %p170
      %p172 = scmp.ne.s32.totalorder %s161, %s164
      %p173 = scmp.eq.s32.totalorder %s24, 3
      %p174 = por %p172, %p173
      %p175 = scmp.ne.s32.totalorder %s164, %s165
      %p176 = scmp.eq.s32.totalorder %s24, 0
      %p177 = por %p175, %p176
      %p178 = scmp.ne.s32.totalorder %s164, %s165
      %p179 = scmp.eq.s32.totalorder %s25, 3
      %p180 = por %p178, %p179
      %p182 = scmp.ne.s32.totalorder %s165, %s181
      %p183 = scmp.eq.s32.totalorder %s25, 0
      %p184 = por %p182, %p183
      %s185 = ssub.s32 %s27, %s34
      %p186 = scmp.eq.s32.totalorder %s185, 0
      %s188 = sadd.s32 %s187, 1
      %s189 = scalar_select %p186, %s187, %s188
      %p192 = pneg %p186
      %p193 = scmp.eq.s32.totalorder %s19, 3
      %p194 = por %p192, %p193
      %p195 = scmp.ne.s32.totalorder %s187, %s190
      %p196 = scmp.eq.s32.totalorder %s19, 0
      %p197 = por %p195, %p196
      %p198 = scmp.ne.s32.totalorder %s187, %s190
      %p199 = scmp.eq.s32.totalorder %s24, 3
      %p200 = por %p198, %p199
      %p201 = scmp.ne.s32.totalorder %s190, %s191
      %p202 = scmp.eq.s32.totalorder %s24, 0
      %p203 = por %p201, %p202
      %p204 = scmp.ne.s32.totalorder %s190, %s191
      %p205 = scmp.eq.s32.totalorder %s25, 3
      %p206 = por %p204, %p205
      %p208 = scmp.ne.s32.totalorder %s191, %s207
      %p209 = scmp.eq.s32.totalorder %s25, 0
      %p210 = por %p208, %p209
      %s211 = ssub.s32 %s26, %s38
      %p212 = scmp.eq.s32.totalorder %s211, 0
      %s214 = sadd.s32 %s213, 1
      %s215 = scalar_select %p212, %s213, %s214
      %p218 = pneg %p212
      %p219 = scmp.eq.s32.totalorder %s19, 3
      %p220 = por %p218, %p219
      %p221 = scmp.ne.s32.totalorder %s213, %s216
      %p222 = scmp.eq.s32.totalorder %s19, 0
      %p223 = por %p221, %p222
      %p224 = scmp.ne.s32.totalorder %s213, %s216
      %p225 = scmp.eq.s32.totalorder %s24, 3
      %p226 = por %p224, %p225
      %p227 = scmp.ne.s32.totalorder %s216, %s217
      %p228 = scmp.eq.s32.totalorder %s24, 0
      %p229 = por %p227, %p228
      %p230 = scmp.ne.s32.totalorder %s216, %s217
      %p231 = scmp.eq.s32.totalorder %s25, 3
      %p232 = por %p230, %p231
      %p234 = scmp.ne.s32.totalorder %s217, %s233
      %p235 = scmp.eq.s32.totalorder %s25, 0
      %p236 = por %p234, %p235
      %p237 = scmp.le.s32.totalorder 1, %s19
      %p238 = scmp.lt.s32.totalorder %s19, 5
      %p239 = pnand %p237, %p238
      %p240 = pneg %p239
      // Predicated region
      $region9: #{tpu_custom_call.1} parent=5 // pred_check
        _
      $region10: #{tpu_custom_call.1} parent=5 // pred_check_branch
        %242 = sbr.rel (%p239) target = $region12
      $region11: #{tpu_custom_call.1} parent=5 // pred_region
        %s243 = ssub.s32 %s19, 1
        // Predicated region
        $region13: #{tpu_custom_call.1} parent=11 // pred_check
          %p244 = pneg %p130
        $region14: #{tpu_custom_call.1} parent=11 // pred_check_branch
          %246 = sbr.rel (%p244) target = $region16
        $region15: #{tpu_custom_call.1} parent=11 // pred_region
          _
        $region16: #{tpu_custom_call.1} parent=11 // pred_fallthru
          _
        // Predicated region
        $region17: #{tpu_custom_call.1} parent=11 // pred_check
          %p247 = pneg %p151
        $region18: #{tpu_custom_call.1} parent=11 // pred_check_branch
          %249 = sbr.rel (%p247) target = $region20
        $region19: #{tpu_custom_call.1} parent=11 // pred_region
          _
        $region20: #{tpu_custom_call.1} parent=11 // pred_fallthru
          _
      $region12: #{tpu_custom_call.1} parent=5 // pred_fallthru
        _
      %p250 = scmp.lt.s32.totalorder %s19, 4
      // Predicated region
      $region21: #{tpu_custom_call.1} parent=5 // pred_check
        %p251 = pneg %p250
      $region22: #{tpu_custom_call.1} parent=5 // pred_check_branch
        %253 = sbr.rel (%p251) target = $region24
      $region23: #{tpu_custom_call.1} parent=5 // pred_region
        // Predicated region
        $region25: #{tpu_custom_call.1} parent=23 // pred_check
          %p254 = pneg %p51
        $region26: #{tpu_custom_call.1} parent=23 // pred_check_branch
          %256 = sbr.rel (%p254) target = $region28
        $region27: #{tpu_custom_call.1} parent=23 // pred_region
          %p257 = scmp.lt.s32.totalorder %s26, 1
          %s258 = scalar_select %p257, %s26, 1
          %s259 = smul.addr %s258, 8
          %s260 = scalar_lea.vmem %s0, %s259
        $region28: #{tpu_custom_call.1} parent=23 // pred_fallthru
          _
        // Predicated region
        $region29: #{tpu_custom_call.1} parent=23 // pred_check
          %p261 = pneg %p77
        $region30: #{tpu_custom_call.1} parent=23 // pred_check_branch
          %263 = sbr.rel (%p261) target = $region32
        $region31: #{tpu_custom_call.1} parent=23 // pred_region
          %s264 = smul.u32 2, %s27
          %p265 = scmp.lt.s32.totalorder %s264, 3
          %s266 = scalar_select %p265, %s264, 3
          %s267 = smul.addr %s266, 8
          %s268 = scalar_lea.vmem %s1, %s267
          %s269 = smul.u32 2, %s27
        $region32: #{tpu_custom_call.1} parent=23 // pred_fallthru
          _
        // Predicated region
        $region33: #{tpu_custom_call.1} parent=23 // pred_check
          %p270 = pneg %p103
        $region34: #{tpu_custom_call.1} parent=23 // pred_check_branch
          %272 = sbr.rel (%p270) target = $region36
        $region35: #{tpu_custom_call.1} parent=23 // pred_region
          %s273 = sand.u32 %s93, 1
          %s274 = scalar_lea.sflag [#allocation4], %s273
          %s275 = sand.u32 %s93, 1
          %s276 = smul.addr %s275, 512
          %s277 = scalar_lea.vmem [#allocation3], %s276
          %s278 = smul.u32 16, %s27
          %s280 = ssub.s32 8192, 8192
          %281 = vsyncadd %s274, %s280
          %s282 = smul.addr %s278, 4
          %s283 = smul.addr %s282, 128
          %s284 = scalar_lea.hbm %s2, %s283
          %s285 = sshll.u32 %s277, 4
          %s286 = int_to_ptr.vmem [resolvable:$true] %s285
          %291 = dma.hbm_to_vmem [thread:$0]  %s284, 8192, %s286, %s274, 128, 128, 8
        $region36: #{tpu_custom_call.1} parent=23 // pred_fallthru
          _
        // Predicated region
        $region37: #{tpu_custom_call.1} parent=23 // pred_check
          %p292 = pneg %p171
        $region38: #{tpu_custom_call.1} parent=23 // pred_check_branch
          %294 = sbr.rel (%p292) target = $region40
        $region39: #{tpu_custom_call.1} parent=23 // pred_region
          %s295 = smul.u32 2, %s27
          %p296 = scmp.lt.s32.totalorder %s295, 3
          %s297 = scalar_select %p296, %s295, 3
          %s298 = smul.addr %s297, 8
          %s299 = scalar_lea.vmem %s5, %s298
          %s300 = smul.u32 2, %s27
        $region40: #{tpu_custom_call.1} parent=23 // pred_fallthru
          _
        // Predicated region
        $region41: #{tpu_custom_call.1} parent=23 // pred_check
          %p301 = pneg %p197
        $region42: #{tpu_custom_call.1} parent=23 // pred_check_branch
          %303 = sbr.rel (%p301) target = $region44
        $region43: #{tpu_custom_call.1} parent=23 // pred_region
          %s304 = smul.u32 2, %s27
          %p305 = scmp.lt.s32.totalorder %s304, 3
          %s306 = scalar_select %p305, %s304, 3
          %s307 = smul.addr %s306, 8
          %s308 = scalar_lea.vmem %s6, %s307
          %s309 = smul.u32 2, %s27
        $region44: #{tpu_custom_call.1} parent=23 // pred_fallthru
          _
      $region24: #{tpu_custom_call.1} parent=5 // pred_fallthru
        _
      %p310 = scmp.le.s32.totalorder 1, %s19
      %p311 = scmp.lt.s32.totalorder %s19, 5
      %p312 = pnand %p310, %p311
      %p313 = pneg %p312
      // Predicated region
      $region45: #{tpu_custom_call.1} parent=5 // pred_check
        _
      $region46: #{tpu_custom_call.1} parent=5 // pred_check_branch
        %315 = sbr.rel (%p312) target = $region48
      $region47: #{tpu_custom_call.1} parent=5 // pred_region
        %s316 = ssub.s32 %s19, 1
        %s317 = sand.u32 %s96, 1
        %s318 = scalar_lea.sflag [#allocation4], %s317
        %s319 = sand.u32 %s96, 1
        %s320 = smul.addr %s319, 512
        %s321 = scalar_lea.vmem [#allocation3], %s320
        // Predicated region
        $region49: #{tpu_custom_call.1} parent=47 // pred_check
          %p322 = pneg %p109
        $region50: #{tpu_custom_call.1} parent=47 // pred_check_branch
          %324 = sbr.rel (%p322) target = $region52
        $region51: #{tpu_custom_call.1} parent=47 // pred_region
          %325 = dma.done %s318, 8192
        $region52: #{tpu_custom_call.1} parent=47 // pred_fallthru
          _
        %p326 = scmp.lt.s32.totalorder %s28, 1
        %s327 = scalar_select %p326, %s28, 1
        %s328 = smul.addr %s327, 8
        %s329 = scalar_lea.vmem %s0, %s328
        %p330 = pneg %p57
        %p331 = pneg %p54
        %s332 = smul.u32 2, %s29
        %p333 = scmp.lt.s32.totalorder %s332, 3
        %s334 = scalar_select %p333, %s332, 3
        %s335 = smul.addr %s334, 8
        %s336 = scalar_lea.vmem %s1, %s335
        %p337 = pneg %p83
        %p338 = pneg %p80
        %s339 = sand.u32 %s96, 1
        %s340 = scalar_lea.sflag [#allocation4], %s339
        %s341 = sand.u32 %s96, 1
        %s342 = smul.addr %s341, 512
        %s343 = scalar_lea.vmem [#allocation3], %s342
        %p344 = pneg %p109
        %p345 = pneg %p106
        %p346 = pneg %p130
        %p347 = pneg %p127
        %p348 = pneg %p151
        %p349 = pneg %p148
        %s350 = smul.u32 2, %s29
        %p351 = scmp.lt.s32.totalorder %s350, 3
        %s352 = scalar_select %p351, %s350, 3
        %s353 = smul.addr %s352, 8
        %s354 = scalar_lea.vmem %s5, %s353
        %p355 = pneg %p177
        %p356 = pneg %p174
        %s357 = smul.u32 2, %s29
        %p358 = scmp.lt.s32.totalorder %s357, 3
        %s359 = scalar_select %p358, %s357, 3
        %s360 = smul.addr %s359, 8
        %s361 = scalar_lea.vmem %s6, %s360
        %p362 = pneg %p203
        %p363 = pneg %p200
        %p364 = pneg %p229
        %p365 = pneg %p226
        %s366 = sand.u32 %s216, 1
        %s367 = scalar_lea.sflag [#allocation5], %s366
        %s368 = sand.u32 %s216, 1
        %s369 = smul.addr %s368, 8
        %s370 = scalar_lea.vmem [#allocation6], %s369
        %p371 = scmp.lt.s32.totalorder %s28, 1
        %s372 = scalar_select %p371, %s28, 1
        %s373 = smul.addr %s372, 8
        %s374 = scalar_lea.vmem %s0, %s373
        %s375 = smul.u32 2, %s29
        %p376 = scmp.lt.s32.totalorder %s375, 3
        %s377 = scalar_select %p376, %s375, 3
        %s378 = smul.addr %s377, 8
        %s379 = scalar_lea.vmem %s1, %s378
        %s380 = smul.u32 2, %s29
        %s381 = smul.u32 16, %s29
        %s382 = smul.u32 2, %s29
        %p383 = scmp.lt.s32.totalorder %s382, 3
        %s384 = scalar_select %p383, %s382, 3
        %s385 = smul.addr %s384, 8
        %s386 = scalar_lea.vmem %s5, %s385
        %s387 = smul.u32 2, %s29
        %s388 = smul.u32 2, %s29
        %p389 = scmp.lt.s32.totalorder %s388, 3
        %s390 = scalar_select %p389, %s388, 3
        %s391 = smul.addr %s390, 8
        %s392 = scalar_lea.vmem %s6, %s391
        %s393 = smul.u32 2, %s29
        %p394 = scmp.eq.s32.totalorder %s29, 0
        // Predicated region
        $region53: #{tpu_custom_call.1} parent=47 // pred_check
          %p395 = pneg %p394
        $region54: #{tpu_custom_call.1} parent=47 // pred_check_branch
          %397 = sbr.rel (%p395) target = $region56
        $region55: #{tpu_custom_call.1} parent=47 // pred_region
          %vm398 = vcmask 130048
          %399 = vst.msk [vmem:[#allocation2] sm:$0xff] %vm398, 0.0
          %400 = vst.msk [vmem:[#allocation2 + $0x8] sm:$0xff] %vm398, 0.0
        $region56: #{tpu_custom_call.1} parent=47 // pred_fallthru
          _
        %v401 = vld [vmem:[%s374] sm:$0xff]
        %v402 = vld [vmem:[%s379] sm:$0xff]
        %v403 = vld [vmem:[%s379 + $0x8] sm:$0xff]
        %vm404 = vcmask 64512
        %v406 = vsel %vm404, %v402, 0
        %v409 = vsel %vm404, %v403, 0
        %411 = vmatprep.subr.mxu0 0.0
        %412 = vmatpush1.msra.mxu0 %v401
        %413 = vmatprep.subr.mxu0 0.0
        %414 = vmatpush1.msra.mxu0 0.0
        %415 = vmatprep.subr.mxu0 0.0
        %416 = vmatpush1.msra.mxu0 0.0
        %417 = vmatprep.subr.mxu0 0.0
        %418 = vmatpush1.msra.mxu0 0.0
        %419 = vmatprep.subr.mxu0 0.0
        %420 = vmatpush1.msra.mxu0 0.0
        %421 = vmatprep.subr.mxu0 0.0
        %422 = vmatpush1.msra.mxu0 0.0
        %423 = vmatprep.subr.mxu0 0.0
        %424 = vmatpush1.msra.mxu0 0.0
        %425 = vmatprep.subr.mxu0 0.0
        %426 = vmatpush1.msra.mxu0 0.0
        %427 = vmatprep.subr.mxu0 0.0
        %428 = vmatpush1.msra.mxu0 0.0
        %429 = vmatprep.subr.mxu0 0.0
        %430 = vmatpush1.msra.mxu0 0.0
        %431 = vmatprep.subr.mxu0 0.0
        %432 = vmatpush1.msra.mxu0 0.0
        %433 = vmatprep.subr.mxu0 0.0
        %434 = vmatpush1.msra.mxu0 0.0
        %435 = vmatprep.subr.mxu0 0.0
        %436 = vmatpush1.msra.mxu0 0.0
        %437 = vmatprep.subr.mxu0 0.0
        %438 = vmatpush1.msra.mxu0 0.0
        %439 = vmatprep.subr.mxu0 0.0
        %440 = vmatpush1.msra.mxu0 0.0
        %441 = vmatprep.subr.mxu0 0.0
        %442 = vmatpush1.msra.mxu0 0.0
        %443 = vmatprep.subr.mxu0 0.0
        %444 = vmatpush1.msra.mxu0 0.0
        %445 = vmatprep.subr.mxu0 0.0
        %446 = vmatpush1.msra.mxu0 0.0
        %447 = vmatprep.subr.mxu0 0.0
        %448 = vmatpush1.msra.mxu0 0.0
        %449 = vmatprep.subr.mxu0 0.0
        %450 = vmatpush1.msra.mxu0 0.0
        %451 = vmatprep.subr.mxu0 0.0
        %452 = vmatpush1.msra.mxu0 0.0
        %453 = vmatprep.subr.mxu0 0.0
        %454 = vmatpush1.msra.mxu0 0.0
        %455 = vmatprep.subr.mxu0 0.0
        %456 = vmatpush1.msra.mxu0 0.0
        %457 = vmatprep.subr.mxu0 0.0
        %458 = vmatpush1.msra.mxu0 0.0
        %459 = vmatprep.subr.mxu0 0.0
        %460 = vmatpush1.msra.mxu0 0.0
        %461 = vmatprep.subr.mxu0 0.0
        %462 = vmatpush1.msra.mxu0 0.0
        %463 = vmatprep.subr.mxu0 0.0
        %464 = vmatpush1.msra.mxu0 0.0
        %465 = vmatprep.subr.mxu0 0.0
        %466 = vmatpush1.msra.mxu0 0.0
        %467 = vmatprep.subr.mxu0 0.0
        %468 = vmatpush1.msra.mxu0 0.0
        %469 = vmatprep.subr.mxu0 0.0
        %470 = vmatpush1.msra.mxu0 0.0
        %471 = vmatprep.subr.mxu0 0.0
        %472 = vmatpush1.msra.mxu0 0.0
        %473 = vmatprep.subr.mxu0 0.0
        %474 = vmatpush1.msra.mxu0 0.0
        %475 = vmatprep.mubr.f32.mxu0 0.0
        %476 = vmatmul.mubr.f32.gmra.mrb[0].mxu0 %v406
        %v477 = vpop.f32.mrb[0].mxu0
        %v478 = vadd.f32 0.0, %v477
        %v479 = vpop.f32.mrb[0].mxu0
        %480 = vmatprep.mubr.f32.mxu0 0.0
        %481 = vmatmul.mubr.f32.gmra.mrb[0].mxu0 %v409
        %v482 = vpop.f32.mrb[0].mxu0
        %v483 = vadd.f32 0.0, %v482
        %v484 = vpop.f32.mrb[0].mxu0
        %485 = vdwg.mxu0
        %v488 = vcombine.high %v478, %v478
        %v490 = vunpack.c.l.s4 1966171168
        %v491 = vunpack.c.0.s8 %v490
        %v492 = vlaneseq
        %v493 = vshrl.u32 %v492, 7
        %v494 = vsub.s32 %v491, %v493
        %v495 = vrot.slane %v478, %v494
        %v497 = vunpack.c.l.s4 1966171168
        %v498 = vunpack.c.0.s8 %v497
        %v499 = vlaneseq
        %v500 = vshrl.u32 %v499, 7
        %v501 = vsub.s32 %v498, %v500
        %v502 = vrot.slane %v488, %v501
        %v503 = vcombine.high %v495, %v495
        %v504 = vcombine.high %v502, %v502
        %v506 = vunpack.c.l.s4 1966171168
        %v507 = vunpack.c.0.s8 %v506
        %v508 = vlaneseq
        %v509 = vshrl.u32 %v508, 7
        %v510 = vsub.s32 %v507, %v509
        %v511 = vrot.slane %v495, %v510
        %v513 = vunpack.c.l.s4 1966171168
        %v514 = vunpack.c.0.s8 %v513
        %v515 = vlaneseq
        %v516 = vshrl.u32 %v515, 7
        %v517 = vsub.s32 %v514, %v516
        %v518 = vrot.slane %v502, %v517
        %v520 = vunpack.c.l.s4 1966171168
        %v521 = vunpack.c.0.s8 %v520
        %v522 = vlaneseq
        %v523 = vshrl.u32 %v522, 7
        %v524 = vsub.s32 %v521, %v523
        %v525 = vrot.slane %v503, %v524
        %v527 = vunpack.c.l.s4 1966171168
        %v528 = vunpack.c.0.s8 %v527
        %v529 = vlaneseq
        %v530 = vshrl.u32 %v529, 7
        %v531 = vsub.s32 %v528, %v530
        %v532 = vrot.slane %v504, %v531
        %v533 = vcombine.high %v511, %v511
        %v534 = vcombine.high %v518, %v518
        %v535 = vcombine.high %v525, %v525
        %v536 = vcombine.high %v532, %v532
        %v537 = vcombine.high %v483, %v483
        %v539 = vunpack.c.l.s4 1966171168
        %v540 = vunpack.c.0.s8 %v539
        %v541 = vlaneseq
        %v542 = vshrl.u32 %v541, 7
        %v543 = vsub.s32 %v540, %v542
        %v544 = vrot.slane %v483, %v543
        %v546 = vunpack.c.l.s4 1966171168
        %v547 = vunpack.c.0.s8 %v546
        %v548 = vlaneseq
        %v549 = vshrl.u32 %v548, 7
        %v550 = vsub.s32 %v547, %v549
        %v551 = vrot.slane %v537, %v550
        %v552 = vcombine.high %v544, %v544
        %v553 = vcombine.high %v551, %v551
        %v555 = vunpack.c.l.s4 1966171168
        %v556 = vunpack.c.0.s8 %v555
        %v557 = vlaneseq
        %v558 = vshrl.u32 %v557, 7
        %v559 = vsub.s32 %v556, %v558
        %v560 = vrot.slane %v544, %v559
        %v562 = vunpack.c.l.s4 1966171168
        %v563 = vunpack.c.0.s8 %v562
        %v564 = vlaneseq
        %v565 = vshrl.u32 %v564, 7
        %v566 = vsub.s32 %v563, %v565
        %v567 = vrot.slane %v551, %v566
        %v569 = vunpack.c.l.s4 1966171168
        %v570 = vunpack.c.0.s8 %v569
        %v571 = vlaneseq
        %v572 = vshrl.u32 %v571, 7
        %v573 = vsub.s32 %v570, %v572
        %v574 = vrot.slane %v552, %v573
        %v576 = vunpack.c.l.s4 1966171168
        %v577 = vunpack.c.0.s8 %v576
        %v578 = vlaneseq
        %v579 = vshrl.u32 %v578, 7
        %v580 = vsub.s32 %v577, %v579
        %v581 = vrot.slane %v553, %v580
        %v582 = vcombine.high %v560, %v560
        %v583 = vcombine.high %v567, %v567
        %v584 = vcombine.high %v574, %v574
        %v585 = vcombine.high %v581, %v581
        %v586 = vld [vmem:[%s321] sm:$0xff]
        %v587 = vld [vmem:[%s321 + $0x8] sm:$0xff]
        %v588 = vld [vmem:[%s321 + $0x10] sm:$0xff]
        %v589 = vld [vmem:[%s321 + $0x18] sm:$0xff]
        %v590 = vld [vmem:[%s321 + $0x20] sm:$0xff]
        %v591 = vld [vmem:[%s321 + $0x28] sm:$0xff]
        %v592 = vld [vmem:[%s321 + $0x30] sm:$0xff]
        %v593 = vld [vmem:[%s321 + $0x38] sm:$0xff]
        %v594 = vld [vmem:[%s321 + $0x40] sm:$0xff]
        %v595 = vld [vmem:[%s321 + $0x48] sm:$0xff]
        %v596 = vld [vmem:[%s321 + $0x50] sm:$0xff]
        %v597 = vld [vmem:[%s321 + $0x58] sm:$0xff]
        %v598 = vld [vmem:[%s321 + $0x60] sm:$0xff]
        %v599 = vld [vmem:[%s321 + $0x68] sm:$0xff]
        %v600 = vld [vmem:[%s321 + $0x70] sm:$0xff]
        %v601 = vld [vmem:[%s321 + $0x78] sm:$0xff]
        %v602 = vld [vmem:[%s321 + $0x80] sm:$0xff]
        %v603 = vld [vmem:[%s321 + $0x88] sm:$0xff]
        %v604 = vld [vmem:[%s321 + $0x90] sm:$0xff]
        %v605 = vld [vmem:[%s321 + $0x98] sm:$0xff]
        %v606 = vld [vmem:[%s321 + $0xa0] sm:$0xff]
        %v607 = vld [vmem:[%s321 + $0xa8] sm:$0xff]
        %v608 = vld [vmem:[%s321 + $0xb0] sm:$0xff]
        %v609 = vld [vmem:[%s321 + $0xb8] sm:$0xff]
        %v610 = vld [vmem:[%s321 + $0xc0] sm:$0xff]
        %v611 = vld [vmem:[%s321 + $0xc8] sm:$0xff]
        %v612 = vld [vmem:[%s321 + $0xd0] sm:$0xff]
        %v613 = vld [vmem:[%s321 + $0xd8] sm:$0xff]
        %v614 = vld [vmem:[%s321 + $0xe0] sm:$0xff]
        %v615 = vld [vmem:[%s321 + $0xe8] sm:$0xff]
        %v616 = vld [vmem:[%s321 + $0xf0] sm:$0xff]
        %v617 = vld [vmem:[%s321 + $0xf8] sm:$0xff]
        %v618 = vld [vmem:[%s321 + $0x100] sm:$0xff]
        %v619 = vld [vmem:[%s321 + $0x108] sm:$0xff]
        %v620 = vld [vmem:[%s321 + $0x110] sm:$0xff]
        %v621 = vld [vmem:[%s321 + $0x118] sm:$0xff]
        %v622 = vld [vmem:[%s321 + $0x120] sm:$0xff]
        %v623 = vld [vmem:[%s321 + $0x128] sm:$0xff]
        %v624 = vld [vmem:[%s321 + $0x130] sm:$0xff]
        %v625 = vld [vmem:[%s321 + $0x138] sm:$0xff]
        %v626 = vld [vmem:[%s321 + $0x140] sm:$0xff]
        %v627 = vld [vmem:[%s321 + $0x148] sm:$0xff]
        %v628 = vld [vmem:[%s321 + $0x150] sm:$0xff]
        %v629 = vld [vmem:[%s321 + $0x158] sm:$0xff]
        %v630 = vld [vmem:[%s321 + $0x160] sm:$0xff]
        %v631 = vld [vmem:[%s321 + $0x168] sm:$0xff]
        %v632 = vld [vmem:[%s321 + $0x170] sm:$0xff]
        %v633 = vld [vmem:[%s321 + $0x178] sm:$0xff]
        %v634 = vld [vmem:[%s321 + $0x180] sm:$0xff]
        %v635 = vld [vmem:[%s321 + $0x188] sm:$0xff]
        %v636 = vld [vmem:[%s321 + $0x190] sm:$0xff]
        %v637 = vld [vmem:[%s321 + $0x198] sm:$0xff]
        %v638 = vld [vmem:[%s321 + $0x1a0] sm:$0xff]
        %v639 = vld [vmem:[%s321 + $0x1a8] sm:$0xff]
        %v640 = vld [vmem:[%s321 + $0x1b0] sm:$0xff]
        %v641 = vld [vmem:[%s321 + $0x1b8] sm:$0xff]
        %v642 = vld [vmem:[%s321 + $0x1c0] sm:$0xff]
        %v643 = vld [vmem:[%s321 + $0x1c8] sm:$0xff]
        %v644 = vld [vmem:[%s321 + $0x1d0] sm:$0xff]
        %v645 = vld [vmem:[%s321 + $0x1d8] sm:$0xff]
        %v646 = vld [vmem:[%s321 + $0x1e0] sm:$0xff]
        %v647 = vld [vmem:[%s321 + $0x1e8] sm:$0xff]
        %v648 = vld [vmem:[%s321 + $0x1f0] sm:$0xff]
        %v649 = vld [vmem:[%s321 + $0x1f8] sm:$0xff]
        %vm650 = vcmask 261120
        %v651 = vsel %vm650, %v511, 0
        %653 = vmatprep.subr.mxu0 0.0
        %654 = vmatpush1.msra.mxu0 %v586
        %655 = vmatprep.subr.mxu0 0.0
        %656 = vmatpush1.msra.mxu0 %v587
        %657 = vmatprep.subr.mxu0 0.0
        %658 = vmatpush1.msra.mxu0 %v588
        %659 = vmatprep.subr.mxu0 0.0
        %660 = vmatpush1.msra.mxu0 %v589
        %661 = vmatprep.subr.mxu0 0.0
        %662 = vmatpush1.msra.mxu0 0.0
        %663 = vmatprep.subr.mxu0 0.0
        %664 = vmatpush1.msra.mxu0 0.0
        %665 = vmatprep.subr.mxu0 0.0
        %666 = vmatpush1.msra.mxu0 0.0
        %667 = vmatprep.subr.mxu0 0.0
        %668 = vmatpush1.msra.mxu0 0.0
        %669 = vmatprep.subr.mxu0 0.0
        %670 = vmatpush1.msra.mxu0 0.0
        %671 = vmatprep.subr.mxu0 0.0
        %672 = vmatpush1.msra.mxu0 0.0
        %673 = vmatprep.subr.mxu0 0.0
        %674 = vmatpush1.msra.mxu0 0.0
        %675 = vmatprep.subr.mxu0 0.0
        %676 = vmatpush1.msra.mxu0 0.0
        %677 = vmatprep.subr.mxu0 0.0
        %678 = vmatpush1.msra.mxu0 0.0
        %679 = vmatprep.subr.mxu0 0.0
        %680 = vmatpush1.msra.mxu0 0.0
        %681 = vmatprep.subr.mxu0 0.0
        %682 = vmatpush1.msra.mxu0 0.0
        %683 = vmatprep.subr.mxu0 0.0
        %684 = vmatpush1.msra.mxu0 0.0
        %685 = vmatprep.subr.mxu0 0.0
        %686 = vmatpush1.msra.mxu0 0.0
        %687 = vmatprep.subr.mxu0 0.0
        %688 = vmatpush1.msra.mxu0 0.0
        %689 = vmatprep.subr.mxu0 0.0
        %690 = vmatpush1.msra.mxu0 0.0
        %691 = vmatprep.subr.mxu0 0.0
        %692 = vmatpush1.msra.mxu0 0.0
        %693 = vmatprep.subr.mxu0 0.0
        %694 = vmatpush1.msra.mxu0 0.0
        %695 = vmatprep.subr.mxu0 0.0
        %696 = vmatpush1.msra.mxu0 0.0
        %697 = vmatprep.subr.mxu0 0.0
        %698 = vmatpush1.msra.mxu0 0.0
        %699 = vmatprep.subr.mxu0 0.0
        %700 = vmatpush1.msra.mxu0 0.0
        %701 = vmatprep.subr.mxu0 0.0
        %702 = vmatpush1.msra.mxu0 0.0
        %703 = vmatprep.subr.mxu0 0.0
        %704 = vmatpush1.msra.mxu0 0.0
        %705 = vmatprep.subr.mxu0 0.0
        %706 = vmatpush1.msra.mxu0 0.0
        %707 = vmatprep.subr.mxu0 0.0
        %708 = vmatpush1.msra.mxu0 0.0
        %709 = vmatprep.subr.mxu0 0.0
        %710 = vmatpush1.msra.mxu0 0.0
        %711 = vmatprep.subr.mxu0 0.0
        %712 = vmatpush1.msra.mxu0 0.0
        %713 = vmatprep.subr.mxu0 0.0
        %714 = vmatpush1.msra.mxu0 0.0
        %715 = vmatprep.subr.mxu0 0.0
        %716 = vmatpush1.msra.mxu0 0.0
        %717 = vmatprep.mubr.f32.mxu0 0.0
        %718 = vmatmul.mubr.f32.gmra.mrb[0].mxu0 %v651
        %v719 = vpop.f32.mrb[0].mxu0
        %v720 = vadd.f32 0.0, %v719
        %v721 = vpop.f32.mrb[0].mxu0
        %722 = vdwg.mxu0
        %v723 = vsel %vm650, %v525, 0
        %725 = vmatprep.subr.mxu0 0.0
        %726 = vmatpush1.msra.mxu0 %v590
        %727 = vmatprep.subr.mxu0 0.0
        %728 = vmatpush1.msra.mxu0 %v591
        %729 = vmatprep.subr.mxu0 0.0
        %730 = vmatpush1.msra.mxu0 %v592
        %731 = vmatprep.subr.mxu0 0.0
        %732 = vmatpush1.msra.mxu0 %v593
        %733 = vmatprep.subr.mxu0 0.0
        %734 = vmatpush1.msra.mxu0 0.0
        %735 = vmatprep.subr.mxu0 0.0
        %736 = vmatpush1.msra.mxu0 0.0
        %737 = vmatprep.subr.mxu0 0.0
        %738 = vmatpush1.msra.mxu0 0.0
        %739 = vmatprep.subr.mxu0 0.0
        %740 = vmatpush1.msra.mxu0 0.0
        %741 = vmatprep.subr.mxu0 0.0
        %742 = vmatpush1.msra.mxu0 0.0
        %743 = vmatprep.subr.mxu0 0.0
        %744 = vmatpush1.msra.mxu0 0.0
        %745 = vmatprep.subr.mxu0 0.0
        %746 = vmatpush1.msra.mxu0 0.0
        %747 = vmatprep.subr.mxu0 0.0
        %748 = vmatpush1.msra.mxu0 0.0
        %749 = vmatprep.subr.mxu0 0.0
        %750 = vmatpush1.msra.mxu0 0.0
        %751 = vmatprep.subr.mxu0 0.0
        %752 = vmatpush1.msra.mxu0 0.0
        %753 = vmatprep.subr.mxu0 0.0
        %754 = vmatpush1.msra.mxu0 0.0
        %755 = vmatprep.subr.mxu0 0.0
        %756 = vmatpush1.msra.mxu0 0.0
        %757 = vmatprep.subr.mxu0 0.0
        %758 = vmatpush1.msra.mxu0 0.0
        %759 = vmatprep.subr.mxu0 0.0
        %760 = vmatpush1.msra.mxu0 0.0
        %761 = vmatprep.subr.mxu0 0.0
        %762 = vmatpush1.msra.mxu0 0.0
        %763 = vmatprep.subr.mxu0 0.0
        %764 = vmatpush1.msra.mxu0 0.0
        %765 = vmatprep.subr.mxu0 0.0
        %766 = vmatpush1.msra.mxu0 0.0
        %767 = vmatprep.subr.mxu0 0.0
        %768 = vmatpush1.msra.mxu0 0.0
        %769 = vmatprep.subr.mxu0 0.0
        %770 = vmatpush1.msra.mxu0 0.0
        %771 = vmatprep.subr.mxu0 0.0
        %772 = vmatpush1.msra.mxu0 0.0
        %773 = vmatprep.subr.mxu0 0.0
        %774 = vmatpush1.msra.mxu0 0.0
        %775 = vmatprep.subr.mxu0 0.0
        %776 = vmatpush1.msra.mxu0 0.0
        %777 = vmatprep.subr.mxu0 0.0
        %778 = vmatpush1.msra.mxu0 0.0
        %779 = vmatprep.subr.mxu0 0.0
        %780 = vmatpush1.msra.mxu0 0.0
        %781 = vmatprep.subr.mxu0 0.0
        %782 = vmatpush1.msra.mxu0 0.0
        %783 = vmatprep.subr.mxu0 0.0
        %784 = vmatpush1.msra.mxu0 0.0
        %785 = vmatprep.subr.mxu0 0.0
        %786 = vmatpush1.msra.mxu0 0.0
        %787 = vmatprep.subr.mxu0 0.0
        %788 = vmatpush1.msra.mxu0 0.0
        %789 = vmatprep.mubr.f32.mxu0 0.0
        %790 = vmatmul.mubr.f32.gmra.mrb[0].mxu0 %v723
        %v791 = vpop.f32.mrb[0].mxu0
        %v792 = vadd.f32 0.0, %v791
        %v793 = vpop.f32.mrb[0].mxu0
        %794 = vdwg.mxu0
        %v795 = vsel %vm650, %v533, 0
        %797 = vmatprep.subr.mxu0 0.0
        %798 = vmatpush1.msra.mxu0 %v594
        %799 = vmatprep.subr.mxu0 0.0
        %800 = vmatpush1.msra.mxu0 %v595
        %801 = vmatprep.subr.mxu0 0.0
        %802 = vmatpush1.msra.mxu0 %v596
        %803 = vmatprep.subr.mxu0 0.0
        %804 = vmatpush1.msra.mxu0 %v597
        %805 = vmatprep.subr.mxu0 0.0
        %806 = vmatpush1.msra.mxu0 0.0
        %807 = vmatprep.subr.mxu0 0.0
        %808 = vmatpush1.msra.mxu0 0.0
        %809 = vmatprep.subr.mxu0 0.0
        %810 = vmatpush1.msra.mxu0 0.0
        %811 = vmatprep.subr.mxu0 0.0
        %812 = vmatpush1.msra.mxu0 0.0
        %813 = vmatprep.subr.mxu0 0.0
        %814 = vmatpush1.msra.mxu0 0.0
        %815 = vmatprep.subr.mxu0 0.0
        %816 = vmatpush1.msra.mxu0 0.0
        %817 = vmatprep.subr.mxu0 0.0
        %818 = vmatpush1.msra.mxu0 0.0
        %819 = vmatprep.subr.mxu0 0.0
        %820 = vmatpush1.msra.mxu0 0.0
        %821 = vmatprep.subr.mxu0 0.0
        %822 = vmatpush1.msra.mxu0 0.0
        %823 = vmatprep.subr.mxu0 0.0
        %824 = vmatpush1.msra.mxu0 0.0
        %825 = vmatprep.subr.mxu0 0.0
        %826 = vmatpush1.msra.mxu0 0.0
        %827 = vmatprep.subr.mxu0 0.0
        %828 = vmatpush1.msra.mxu0 0.0
        %829 = vmatprep.subr.mxu0 0.0
        %830 = vmatpush1.msra.mxu0 0.0
        %831 = vmatprep.subr.mxu0 0.0
        %832 = vmatpush1.msra.mxu0 0.0
        %833 = vmatprep.subr.mxu0 0.0
        %834 = vmatpush1.msra.mxu0 0.0
        %835 = vmatprep.subr.mxu0 0.0
        %836 = vmatpush1.msra.mxu0 0.0
        %837 = vmatprep.subr.mxu0 0.0
        %838 = vmatpush1.msra.mxu0 0.0
        %839 = vmatprep.subr.mxu0 0.0
        %840 = vmatpush1.msra.mxu0 0.0
        %841 = vmatprep.subr.mxu0 0.0
        %842 = vmatpush1.msra.mxu0 0.0
        %843 = vmatprep.subr.mxu0 0.0
        %844 = vmatpush1.msra.mxu0 0.0
        %845 = vmatprep.subr.mxu0 0.0
        %846 = vmatpush1.msra.mxu0 0.0
        %847 = vmatprep.subr.mxu0 0.0
        %848 = vmatpush1.msra.mxu0 0.0
        %849 = vmatprep.subr.mxu0 0.0
        %850 = vmatpush1.msra.mxu0 0.0
        %851 = vmatprep.subr.mxu0 0.0
        %852 = vmatpush1.msra.mxu0 0.0
        %853 = vmatprep.subr.mxu0 0.0
        %854 = vmatpush1.msra.mxu0 0.0
        %855 = vmatprep.subr.mxu0 0.0
        %856 = vmatpush1.msra.mxu0 0.0
        %857 = vmatprep.subr.mxu0 0.0
        %858 = vmatpush1.msra.mxu0 0.0
        %859 = vmatprep.subr.mxu0 0.0
        %860 = vmatpush1.msra.mxu0 0.0
        %861 = vmatprep.mubr.f32.mxu0 0.0
        %862 = vmatmul.mubr.f32.gmra.mrb[0].mxu0 %v795
        %v863 = vpop.f32.mrb[0].mxu0
        %v864 = vadd.f32 0.0, %v863
        %v865 = vpop.f32.mrb[0].mxu0
        %866 = vdwg.mxu0
        %v867 = vsel %vm650, %v535, 0
        %869 = vmatprep.subr.mxu0 0.0
        %870 = vmatpush1.msra.mxu0 %v598
        %871 = vmatprep.subr.mxu0 0.0
        %872 = vmatpush1.msra.mxu0 %v599
        %873 = vmatprep.subr.mxu0 0.0
        %874 = vmatpush1.msra.mxu0 %v600
        %875 = vmatprep.subr.mxu0 0.0
        %876 = vmatpush1.msra.mxu0 %v601
        %877 = vmatprep.subr.mxu0 0.0
        %878 = vmatpush1.msra.mxu0 0.0
        %879 = vmatprep.subr.mxu0 0.0
        %880 = vmatpush1.msra.mxu0 0.0
        %881 = vmatprep.subr.mxu0 0.0
        %882 = vmatpush1.msra.mxu0 0.0
        %883 = vmatprep.subr.mxu0 0.0
        %884 = vmatpush1.msra.mxu0 0.0
        %885 = vmatprep.subr.mxu0 0.0
        %886 = vmatpush1.msra.mxu0 0.0
        %887 = vmatprep.subr.mxu0 0.0
        %888 = vmatpush1.msra.mxu0 0.0
        %889 = vmatprep.subr.mxu0 0.0
        %890 = vmatpush1.msra.mxu0 0.0
        %891 = vmatprep.subr.mxu0 0.0
        %892 = vmatpush1.msra.mxu0 0.0
        %893 = vmatprep.subr.mxu0 0.0
        %894 = vmatpush1.msra.mxu0 0.0
        %895 = vmatprep.subr.mxu0 0.0
        %896 = vmatpush1.msra.mxu0 0.0
        %897 = vmatprep.subr.mxu0 0.0
        %898 = vmatpush1.msra.mxu0 0.0
        %899 = vmatprep.subr.mxu0 0.0
        %900 = vmatpush1.msra.mxu0 0.0
        %901 = vmatprep.subr.mxu0 0.0
        %902 = vmatpush1.msra.mxu0 0.0
        %903 = vmatprep.subr.mxu0 0.0
        %904 = vmatpush1.msra.mxu0 0.0
        %905 = vmatprep.subr.mxu0 0.0
        %906 = vmatpush1.msra.mxu0 0.0
        %907 = vmatprep.subr.mxu0 0.0
        %908 = vmatpush1.msra.mxu0 0.0
        %909 = vmatprep.subr.mxu0 0.0
        %910 = vmatpush1.msra.mxu0 0.0
        %911 = vmatprep.subr.mxu0 0.0
        %912 = vmatpush1.msra.mxu0 0.0
        %913 = vmatprep.subr.mxu0 0.0
        %914 = vmatpush1.msra.mxu0 0.0
        %915 = vmatprep.subr.mxu0 0.0
        %916 = vmatpush1.msra.mxu0 0.0
        %917 = vmatprep.subr.mxu0 0.0
        %918 = vmatpush1.msra.mxu0 0.0
        %919 = vmatprep.subr.mxu0 0.0
        %920 = vmatpush1.msra.mxu0 0.0
        %921 = vmatprep.subr.mxu0 0.0
        %922 = vmatpush1.msra.mxu0 0.0
        %923 = vmatprep.subr.mxu0 0.0
        %924 = vmatpush1.msra.mxu0 0.0
        %925 = vmatprep.subr.mxu0 0.0
        %926 = vmatpush1.msra.mxu0 0.0
        %927 = vmatprep.subr.mxu0 0.0
        %928 = vmatpush1.msra.mxu0 0.0
        %929 = vmatprep.subr.mxu0 0.0
        %930 = vmatpush1.msra.mxu0 0.0
        %931 = vmatprep.subr.mxu0 0.0
        %932 = vmatpush1.msra.mxu0 0.0
        %933 = vmatprep.mubr.f32.mxu0 0.0
        %934 = vmatmul.mubr.f32.gmra.mrb[0].mxu0 %v867
        %v935 = vpop.f32.mrb[0].mxu0
        %v936 = vadd.f32 0.0, %v935
        %v937 = vpop.f32.mrb[0].mxu0
        %938 = vdwg.mxu0
        %v939 = vsel %vm650, %v518, 0
        %941 = vmatprep.subr.mxu0 0.0
        %942 = vmatpush1.msra.mxu0 %v602
        %943 = vmatprep.subr.mxu0 0.0
        %944 = vmatpush1.msra.mxu0 %v603
        %945 = vmatprep.subr.mxu0 0.0
        %946 = vmatpush1.msra.mxu0 %v604
        %947 = vmatprep.subr.mxu0 0.0
        %948 = vmatpush1.msra.mxu0 %v605
        %949 = vmatprep.subr.mxu0 0.0
        %950 = vmatpush1.msra.mxu0 0.0
        %951 = vmatprep.subr.mxu0 0.0
        %952 = vmatpush1.msra.mxu0 0.0
        %953 = vmatprep.subr.mxu0 0.0
        %954 = vmatpush1.msra.mxu0 0.0
        %955 = vmatprep.subr.mxu0 0.0
        %956 = vmatpush1.msra.mxu0 0.0
        %957 = vmatprep.subr.mxu0 0.0
        %958 = vmatpush1.msra.mxu0 0.0
        %959 = vmatprep.subr.mxu0 0.0
        %960 = vmatpush1.msra.mxu0 0.0
        %961 = vmatprep.subr.mxu0 0.0
        %962 = vmatpush1.msra.mxu0 0.0
        %963 = vmatprep.subr.mxu0 0.0
        %964 = vmatpush1.msra.mxu0 0.0
        %965 = vmatprep.subr.mxu0 0.0
        %966 = vmatpush1.msra.mxu0 0.0
        %967 = vmatprep.subr.mxu0 0.0
        %968 = vmatpush1.msra.mxu0 0.0
        %969 = vmatprep.subr.mxu0 0.0
        %970 = vmatpush1.msra.mxu0 0.0
        %971 = vmatprep.subr.mxu0 0.0
        %972 = vmatpush1.msra.mxu0 0.0
        %973 = vmatprep.subr.mxu0 0.0
        %974 = vmatpush1.msra.mxu0 0.0
        %975 = vmatprep.subr.mxu0 0.0
        %976 = vmatpush1.msra.mxu0 0.0
        %977 = vmatprep.subr.mxu0 0.0
        %978 = vmatpush1.msra.mxu0 0.0
        %979 = vmatprep.subr.mxu0 0.0
        %980 = vmatpush1.msra.mxu0 0.0
        %981 = vmatprep.subr.mxu0 0.0
        %982 = vmatpush1.msra.mxu0 0.0
        %983 = vmatprep.subr.mxu0 0.0
        %984 = vmatpush1.msra.mxu0 0.0
        %985 = vmatprep.subr.mxu0 0.0
        %986 = vmatpush1.msra.mxu0 0.0
        %987 = vmatprep.subr.mxu0 0.0
        %988 = vmatpush1.msra.mxu0 0.0
        %989 = vmatprep.subr.mxu0 0.0
        %990 = vmatpush1.msra.mxu0 0.0
        %991 = vmatprep.subr.mxu0 0.0
        %992 = vmatpush1.msra.mxu0 0.0
        %993 = vmatprep.subr.mxu0 0.0
        %994 = vmatpush1.msra.mxu0 0.0
        %995 = vmatprep.subr.mxu0 0.0
        %996 = vmatpush1.msra.mxu0 0.0
        %997 = vmatprep.subr.mxu0 0.0
        %998 = vmatpush1.msra.mxu0 0.0
        %999 = vmatprep.subr.mxu0 0.0
        %1000 = vmatpush1.msra.mxu0 0.0
        %1001 = vmatprep.subr.mxu0 0.0
        %1002 = vmatpush1.msra.mxu0 0.0
        %1003 = vmatprep.subr.mxu0 0.0
        %1004 = vmatpush1.msra.mxu0 0.0
        %1005 = vmatprep.mubr.f32.mxu0 0.0
        %1006 = vmatmul.mubr.f32.gmra.mrb[0].mxu0 %v939
        %v1007 = vpop.f32.mrb[0].mxu0
        %v1008 = vadd.f32 0.0, %v1007
        %v1009 = vpop.f32.mrb[0].mxu0
        %1010 = vdwg.mxu0
        %v1011 = vsel %vm650, %v532, 0
        %1013 = vmatprep.subr.mxu0 0.0
        %1014 = vmatpush1.msra.mxu0 %v606
        %1015 = vmatprep.subr.mxu0 0.0
        %1016 = vmatpush1.msra.mxu0 %v607
        %1017 = vmatprep.subr.mxu0 0.0
        %1018 = vmatpush1.msra.mxu0 %v608
        %1019 = vmatprep.subr.mxu0 0.0
        %1020 = vmatpush1.msra.mxu0 %v609
        %1021 = vmatprep.subr.mxu0 0.0
        %1022 = vmatpush1.msra.mxu0 0.0
        %1023 = vmatprep.subr.mxu0 0.0
        %1024 = vmatpush1.msra.mxu0 0.0
        %1025 = vmatprep.subr.mxu0 0.0
        %1026 = vmatpush1.msra.mxu0 0.0
        %1027 = vmatprep.subr.mxu0 0.0
        %1028 = vmatpush1.msra.mxu0 0.0
        %1029 = vmatprep.subr.mxu0 0.0
        %1030 = vmatpush1.msra.mxu0 0.0
        %1031 = vmatprep.subr.mxu0 0.0
        %1032 = vmatpush1.msra.mxu0 0.0
        %1033 = vmatprep.subr.mxu0 0.0
        %1034 = vmatpush1.msra.mxu0 0.0
        %1035 = vmatprep.subr.mxu0 0.0
        %1036 = vmatpush1.msra.mxu0 0.0
        %1037 = vmatprep.subr.mxu0 0.0
        %1038 = vmatpush1.msra.mxu0 0.0
        %1039 = vmatprep.subr.mxu0 0.0
        %1040 = vmatpush1.msra.mxu0 0.0
        %1041 = vmatprep.subr.mxu0 0.0
        %1042 = vmatpush1.msra.mxu0 0.0
        %1043 = vmatprep.subr.mxu0 0.0
        %1044 = vmatpush1.msra.mxu0 0.0
        %1045 = vmatprep.subr.mxu0 0.0
        %1046 = vmatpush1.msra.mxu0 0.0
        %1047 = vmatprep.subr.mxu0 0.0
        %1048 = vmatpush1.msra.mxu0 0.0
        %1049 = vmatprep.subr.mxu0 0.0
        %1050 = vmatpush1.msra.mxu0 0.0
        %1051 = vmatprep.subr.mxu0 0.0
        %1052 = vmatpush1.msra.mxu0 0.0
        %1053 = vmatprep.subr.mxu0 0.0
        %1054 = vmatpush1.msra.mxu0 0.0
        %1055 = vmatprep.subr.mxu0 0.0
        %1056 = vmatpush1.msra.mxu0 0.0
        %1057 = vmatprep.subr.mxu0 0.0
        %1058 = vmatpush1.msra.mxu0 0.0
        %1059 = vmatprep.subr.mxu0 0.0
        %1060 = vmatpush1.msra.mxu0 0.0
        %1061 = vmatprep.subr.mxu0 0.0
        %1062 = vmatpush1.msra.mxu0 0.0
        %1063 = vmatprep.subr.mxu0 0.0
        %1064 = vmatpush1.msra.mxu0 0.0
        %1065 = vmatprep.subr.mxu0 0.0
        %1066 = vmatpush1.msra.mxu0 0.0
        %1067 = vmatprep.subr.mxu0 0.0
        %1068 = vmatpush1.msra.mxu0 0.0
        %1069 = vmatprep.subr.mxu0 0.0
        %1070 = vmatpush1.msra.mxu0 0.0
        %1071 = vmatprep.subr.mxu0 0.0
        %1072 = vmatpush1.msra.mxu0 0.0
        %1073 = vmatprep.subr.mxu0 0.0
        %1074 = vmatpush1.msra.mxu0 0.0
        %1075 = vmatprep.subr.mxu0 0.0
        %1076 = vmatpush1.msra.mxu0 0.0
        %1077 = vmatprep.mubr.f32.mxu0 0.0
        %1078 = vmatmul.mubr.f32.gmra.mrb[0].mxu0 %v1011
        %v1079 = vpop.f32.mrb[0].mxu0
        %v1080 = vadd.f32 0.0, %v1079
        %v1081 = vpop.f32.mrb[0].mxu0
        %1082 = vdwg.mxu0
        %v1083 = vsel %vm650, %v534, 0
        %1085 = vmatprep.subr.mxu0 0.0
        %1086 = vmatpush1.msra.mxu0 %v610
        %1087 = vmatprep.subr.mxu0 0.0
        %1088 = vmatpush1.msra.mxu0 %v611
        %1089 = vmatprep.subr.mxu0 0.0
        %1090 = vmatpush1.msra.mxu0 %v612
        %1091 = vmatprep.subr.mxu0 0.0
        %1092 = vmatpush1.msra.mxu0 %v613
        %1093 = vmatprep.subr.mxu0 0.0
        %1094 = vmatpush1.msra.mxu0 0.0
        %1095 = vmatprep.subr.mxu0 0.0
        %1096 = vmatpush1.msra.mxu0 0.0
        %1097 = vmatprep.subr.mxu0 0.0
        %1098 = vmatpush1.msra.mxu0 0.0
        %1099 = vmatprep.subr.mxu0 0.0
        %1100 = vmatpush1.msra.mxu0 0.0
        %1101 = vmatprep.subr.mxu0 0.0
        %1102 = vmatpush1.msra.mxu0 0.0
        %1103 = vmatprep.subr.mxu0 0.0
        %1104 = vmatpush1.msra.mxu0 0.0
        %1105 = vmatprep.subr.mxu0 0.0
        %1106 = vmatpush1.msra.mxu0 0.0
        %1107 = vmatprep.subr.mxu0 0.0
        %1108 = vmatpush1.msra.mxu0 0.0
        %1109 = vmatprep.subr.mxu0 0.0
        %1110 = vmatpush1.msra.mxu0 0.0
        %1111 = vmatprep.subr.mxu0 0.0
        %1112 = vmatpush1.msra.mxu0 0.0
        %1113 = vmatprep.subr.mxu0 0.0
        %1114 = vmatpush1.msra.mxu0 0.0
        %1115 = vmatprep.subr.mxu0 0.0
        %1116 = vmatpush1.msra.mxu0 0.0
        %1117 = vmatprep.subr.mxu0 0.0
        %1118 = vmatpush1.msra.mxu0 0.0
        %1119 = vmatprep.subr.mxu0 0.0
        %1120 = vmatpush1.msra.mxu0 0.0
        %1121 = vmatprep.subr.mxu0 0.0
        %1122 = vmatpush1.msra.mxu0 0.0
        %1123 = vmatprep.subr.mxu0 0.0
        %1124 = vmatpush1.msra.mxu0 0.0
        %1125 = vmatprep.subr.mxu0 0.0
        %1126 = vmatpush1.msra.mxu0 0.0
        %1127 = vmatprep.subr.mxu0 0.0
        %1128 = vmatpush1.msra.mxu0 0.0
        %1129 = vmatprep.subr.mxu0 0.0
        %1130 = vmatpush1.msra.mxu0 0.0
        %1131 = vmatprep.subr.mxu0 0.0
        %1132 = vmatpush1.msra.mxu0 0.0
        %1133 = vmatprep.subr.mxu0 0.0
        %1134 = vmatpush1.msra.mxu0 0.0
        %1135 = vmatprep.subr.mxu0 0.0
        %1136 = vmatpush1.msra.mxu0 0.0
        %1137 = vmatprep.subr.mxu0 0.0
        %1138 = vmatpush1.msra.mxu0 0.0
        %1139 = vmatprep.subr.mxu0 0.0
        %1140 = vmatpush1.msra.mxu0 0.0
        %1141 = vmatprep.subr.mxu0 0.0
        %1142 = vmatpush1.msra.mxu0 0.0
        %1143 = vmatprep.subr.mxu0 0.0
        %1144 = vmatpush1.msra.mxu0 0.0
        %1145 = vmatprep.subr.mxu0 0.0
        %1146 = vmatpush1.msra.mxu0 0.0
        %1147 = vmatprep.subr.mxu0 0.0
        %1148 = vmatpush1.msra.mxu0 0.0
        %1149 = vmatprep.mubr.f32.mxu0 0.0
        %1150 = vmatmul.mubr.f32.gmra.mrb[0].mxu0 %v1083
        %v1151 = vpop.f32.mrb[0].mxu0
        %v1152 = vadd.f32 0.0, %v1151
        %v1153 = vpop.f32.mrb[0].mxu0
        %1154 = vdwg.mxu0
        %v1155 = vsel %vm650, %v536, 0
        %1157 = vmatprep.subr.mxu0 0.0
        %1158 = vmatpush1.msra.mxu0 %v614
        %1159 = vmatprep.subr.mxu0 0.0
        %1160 = vmatpush1.msra.mxu0 %v615
        %1161 = vmatprep.subr.mxu0 0.0
        %1162 = vmatpush1.msra.mxu0 %v616
        %1163 = vmatprep.subr.mxu0 0.0
        %1164 = vmatpush1.msra.mxu0 %v617
        %1165 = vmatprep.subr.mxu0 0.0
        %1166 = vmatpush1.msra.mxu0 0.0
        %1167 = vmatprep.subr.mxu0 0.0
        %1168 = vmatpush1.msra.mxu0 0.0
        %1169 = vmatprep.subr.mxu0 0.0
        %1170 = vmatpush1.msra.mxu0 0.0
        %1171 = vmatprep.subr.mxu0 0.0
        %1172 = vmatpush1.msra.mxu0 0.0
        %1173 = vmatprep.subr.mxu0 0.0
        %1174 = vmatpush1.msra.mxu0 0.0
        %1175 = vmatprep.subr.mxu0 0.0
        %1176 = vmatpush1.msra.mxu0 0.0
        %1177 = vmatprep.subr.mxu0 0.0
        %1178 = vmatpush1.msra.mxu0 0.0
        %1179 = vmatprep.subr.mxu0 0.0
        %1180 = vmatpush1.msra.mxu0 0.0
        %1181 = vmatprep.subr.mxu0 0.0
        %1182 = vmatpush1.msra.mxu0 0.0
        %1183 = vmatprep.subr.mxu0 0.0
        %1184 = vmatpush1.msra.mxu0 0.0
        %1185 = vmatprep.subr.mxu0 0.0
        %1186 = vmatpush1.msra.mxu0 0.0
        %1187 = vmatprep.subr.mxu0 0.0
        %1188 = vmatpush1.msra.mxu0 0.0
        %1189 = vmatprep.subr.mxu0 0.0
        %1190 = vmatpush1.msra.mxu0 0.0
        %1191 = vmatprep.subr.mxu0 0.0
        %1192 = vmatpush1.msra.mxu0 0.0
        %1193 = vmatprep.subr.mxu0 0.0
        %1194 = vmatpush1.msra.mxu0 0.0
        %1195 = vmatprep.subr.mxu0 0.0
        %1196 = vmatpush1.msra.mxu0 0.0
        %1197 = vmatprep.subr.mxu0 0.0
        %1198 = vmatpush1.msra.mxu0 0.0
        %1199 = vmatprep.subr.mxu0 0.0
        %1200 = vmatpush1.msra.mxu0 0.0
        %1201 = vmatprep.subr.mxu0 0.0
        %1202 = vmatpush1.msra.mxu0 0.0
        %1203 = vmatprep.subr.mxu0 0.0
        %1204 = vmatpush1.msra.mxu0 0.0
        %1205 = vmatprep.subr.mxu0 0.0
        %1206 = vmatpush1.msra.mxu0 0.0
        %1207 = vmatprep.subr.mxu0 0.0
        %1208 = vmatpush1.msra.mxu0 0.0
        %1209 = vmatprep.subr.mxu0 0.0
        %1210 = vmatpush1.msra.mxu0 0.0
        %1211 = vmatprep.subr.mxu0 0.0
        %1212 = vmatpush1.msra.mxu0 0.0
        %1213 = vmatprep.subr.mxu0 0.0
        %1214 = vmatpush1.msra.mxu0 0.0
        %1215 = vmatprep.subr.mxu0 0.0
        %1216 = vmatpush1.msra.mxu0 0.0
        %1217 = vmatprep.subr.mxu0 0.0
        %1218 = vmatpush1.msra.mxu0 0.0
        %1219 = vmatprep.subr.mxu0 0.0
        %1220 = vmatpush1.msra.mxu0 0.0
        %1221 = vmatprep.mubr.f32.mxu0 0.0
        %1222 = vmatmul.mubr.f32.gmra.mrb[0].mxu0 %v1155
        %v1223 = vpop.f32.mrb[0].mxu0
        %v1224 = vadd.f32 0.0, %v1223
        %v1225 = vpop.f32.mrb[0].mxu0
        %1226 = vdwg.mxu0
        %v1227 = vsel %vm650, %v560, 0
        %1229 = vmatprep.subr.mxu0 0.0
        %1230 = vmatpush1.msra.mxu0 %v618
        %1231 = vmatprep.subr.mxu0 0.0
        %1232 = vmatpush1.msra.mxu0 %v619
        %1233 = vmatprep.subr.mxu0 0.0
        %1234 = vmatpush1.msra.mxu0 %v620
        %1235 = vmatprep.subr.mxu0 0.0
        %1236 = vmatpush1.msra.mxu0 %v621
        %1237 = vmatprep.subr.mxu0 0.0
        %1238 = vmatpush1.msra.mxu0 0.0
        %1239 = vmatprep.subr.mxu0 0.0
        %1240 = vmatpush1.msra.mxu0 0.0
        %1241 = vmatprep.subr.mxu0 0.0
        %1242 = vmatpush1.msra.mxu0 0.0
        %1243 = vmatprep.subr.mxu0 0.0
        %1244 = vmatpush1.msra.mxu0 0.0
        %1245 = vmatprep.subr.mxu0 0.0
        %1246 = vmatpush1.msra.mxu0 0.0
        %1247 = vmatprep.subr.mxu0 0.0
        %1248 = vmatpush1.msra.mxu0 0.0
        %1249 = vmatprep.subr.mxu0 0.0
        %1250 = vmatpush1.msra.mxu0 0.0
        %1251 = vmatprep.subr.mxu0 0.0
        %1252 = vmatpush1.msra.mxu0 0.0
        %1253 = vmatprep.subr.mxu0 0.0
        %1254 = vmatpush1.msra.mxu0 0.0
        %1255 = vmatprep.subr.mxu0 0.0
        %1256 = vmatpush1.msra.mxu0 0.0
        %1257 = vmatprep.subr.mxu0 0.0
        %1258 = vmatpush1.msra.mxu0 0.0
        %1259 = vmatprep.subr.mxu0 0.0
        %1260 = vmatpush1.msra.mxu0 0.0
        %1261 = vmatprep.subr.mxu0 0.0
        %1262 = vmatpush1.msra.mxu0 0.0
        %1263 = vmatprep.subr.mxu0 0.0
        %1264 = vmatpush1.msra.mxu0 0.0
        %1265 = vmatprep.subr.mxu0 0.0
        %1266 = vmatpush1.msra.mxu0 0.0
        %1267 = vmatprep.subr.mxu0 0.0
        %1268 = vmatpush1.msra.mxu0 0.0
        %1269 = vmatprep.subr.mxu0 0.0
        %1270 = vmatpush1.msra.mxu0 0.0
        %1271 = vmatprep.subr.mxu0 0.0
        %1272 = vmatpush1.msra.mxu0 0.0
        %1273 = vmatprep.subr.mxu0 0.0
        %1274 = vmatpush1.msra.mxu0 0.0
        %1275 = vmatprep.subr.mxu0 0.0
        %1276 = vmatpush1.msra.mxu0 0.0
        %1277 = vmatprep.subr.mxu0 0.0
        %1278 = vmatpush1.msra.mxu0 0.0
        %1279 = vmatprep.subr.mxu0 0.0
        %1280 = vmatpush1.msra.mxu0 0.0
        %1281 = vmatprep.subr.mxu0 0.0
        %1282 = vmatpush1.msra.mxu0 0.0
        %1283 = vmatprep.subr.mxu0 0.0
        %1284 = vmatpush1.msra.mxu0 0.0
        %1285 = vmatprep.subr.mxu0 0.0
        %1286 = vmatpush1.msra.mxu0 0.0
        %1287 = vmatprep.subr.mxu0 0.0
        %1288 = vmatpush1.msra.mxu0 0.0
        %1289 = vmatprep.subr.mxu0 0.0
        %1290 = vmatpush1.msra.mxu0 0.0
        %1291 = vmatprep.subr.mxu0 0.0
        %1292 = vmatpush1.msra.mxu0 0.0
        %1293 = vmatprep.mubr.f32.mxu0 0.0
        %1294 = vmatmul.mubr.f32.gmra.mrb[0].mxu0 %v1227
        %v1295 = vpop.f32.mrb[0].mxu0
        %v1296 = vadd.f32 0.0, %v1295
        %v1297 = vpop.f32.mrb[0].mxu0
        %1298 = vdwg.mxu0
        %v1299 = vsel %vm650, %v574, 0
        %1301 = vmatprep.subr.mxu0 0.0
        %1302 = vmatpush1.msra.mxu0 %v622
        %1303 = vmatprep.subr.mxu0 0.0
        %1304 = vmatpush1.msra.mxu0 %v623
        %1305 = vmatprep.subr.mxu0 0.0
        %1306 = vmatpush1.msra.mxu0 %v624
        %1307 = vmatprep.subr.mxu0 0.0
        %1308 = vmatpush1.msra.mxu0 %v625
        %1309 = vmatprep.subr.mxu0 0.0
        %1310 = vmatpush1.msra.mxu0 0.0
        %1311 = vmatprep.subr.mxu0 0.0
        %1312 = vmatpush1.msra.mxu0 0.0
        %1313 = vmatprep.subr.mxu0 0.0
        %1314 = vmatpush1.msra.mxu0 0.0
        %1315 = vmatprep.subr.mxu0 0.0
        %1316 = vmatpush1.msra.mxu0 0.0
        %1317 = vmatprep.subr.mxu0 0.0
        %1318 = vmatpush1.msra.mxu0 0.0
        %1319 = vmatprep.subr.mxu0 0.0
        %1320 = vmatpush1.msra.mxu0 0.0
        %1321 = vmatprep.subr.mxu0 0.0
        %1322 = vmatpush1.msra.mxu0 0.0
        %1323 = vmatprep.subr.mxu0 0.0
        %1324 = vmatpush1.msra.mxu0 0.0
        %1325 = vmatprep.subr.mxu0 0.0
        %1326 = vmatpush1.msra.mxu0 0.0
        %1327 = vmatprep.subr.mxu0 0.0
        %1328 = vmatpush1.msra.mxu0 0.0
        %1329 = vmatprep.subr.mxu0 0.0
        %1330 = vmatpush1.msra.mxu0 0.0
        %1331 = vmatprep.subr.mxu0 0.0
        %1332 = vmatpush1.msra.mxu0 0.0
        %1333 = vmatprep.subr.mxu0 0.0
        %1334 = vmatpush1.msra.mxu0 0.0
        %1335 = vmatprep.subr.mxu0 0.0
        %1336 = vmatpush1.msra.mxu0 0.0
        %1337 = vmatprep.subr.mxu0 0.0
        %1338 = vmatpush1.msra.mxu0 0.0
        %1339 = vmatprep.subr.mxu0 0.0
        %1340 = vmatpush1.msra.mxu0 0.0
        %1341 = vmatprep.subr.mxu0 0.0
        %1342 = vmatpush1.msra.mxu0 0.0
        %1343 = vmatprep.subr.mxu0 0.0
        %1344 = vmatpush1.msra.mxu0 0.0
        %1345 = vmatprep.subr.mxu0 0.0
        %1346 = vmatpush1.msra.mxu0 0.0
        %1347 = vmatprep.subr.mxu0 0.0
        %1348 = vmatpush1.msra.mxu0 0.0
        %1349 = vmatprep.subr.mxu0 0.0
        %1350 = vmatpush1.msra.mxu0 0.0
        %1351 = vmatprep.subr.mxu0 0.0
        %1352 = vmatpush1.msra.mxu0 0.0
        %1353 = vmatprep.subr.mxu0 0.0
        %1354 = vmatpush1.msra.mxu0 0.0
        %1355 = vmatprep.subr.mxu0 0.0
        %1356 = vmatpush1.msra.mxu0 0.0
        %1357 = vmatprep.subr.mxu0 0.0
        %1358 = vmatpush1.msra.mxu0 0.0
        %1359 = vmatprep.subr.mxu0 0.0
        %1360 = vmatpush1.msra.mxu0 0.0
        %1361 = vmatprep.subr.mxu0 0.0
        %1362 = vmatpush1.msra.mxu0 0.0
        %1363 = vmatprep.subr.mxu0 0.0
        %1364 = vmatpush1.msra.mxu0 0.0
        %1365 = vmatprep.mubr.f32.mxu0 0.0
        %1366 = vmatmul.mubr.f32.gmra.mrb[0].mxu0 %v1299
        %v1367 = vpop.f32.mrb[0].mxu0
        %v1368 = vadd.f32 0.0, %v1367
        %v1369 = vpop.f32.mrb[0].mxu0
        %1370 = vdwg.mxu0
        %v1371 = vsel %vm650, %v582, 0
        %1373 = vmatprep.subr.mxu0 0.0
        %1374 = vmatpush1.msra.mxu0 %v626
        %1375 = vmatprep.subr.mxu0 0.0
        %1376 = vmatpush1.msra.mxu0 %v627
        %1377 = vmatprep.subr.mxu0 0.0
        %1378 = vmatpush1.msra.mxu0 %v628
        %1379 = vmatprep.subr.mxu0 0.0
        %1380 = vmatpush1.msra.mxu0 %v629
        %1381 = vmatprep.subr.mxu0 0.0
        %1382 = vmatpush1.msra.mxu0 0.0
        %1383 = vmatprep.subr.mxu0 0.0
        %1384 = vmatpush1.msra.mxu0 0.0
        %1385 = vmatprep.subr.mxu0 0.0
        %1386 = vmatpush1.msra.mxu0 0.0
        %1387 = vmatprep.subr.mxu0 0.0
        %1388 = vmatpush1.msra.mxu0 0.0
        %1389 = vmatprep.subr.mxu0 0.0
        %1390 = vmatpush1.msra.mxu0 0.0
        %1391 = vmatprep.subr.mxu0 0.0
        %1392 = vmatpush1.msra.mxu0 0.0
        %1393 = vmatprep.subr.mxu0 0.0
        %1394 = vmatpush1.msra.mxu0 0.0
        %1395 = vmatprep.subr.mxu0 0.0
        %1396 = vmatpush1.msra.mxu0 0.0
        %1397 = vmatprep.subr.mxu0 0.0
        %1398 = vmatpush1.msra.mxu0 0.0
        %1399 = vmatprep.subr.mxu0 0.0
        %1400 = vmatpush1.msra.mxu0 0.0
        %1401 = vmatprep.subr.mxu0 0.0
        %1402 = vmatpush1.msra.mxu0 0.0
        %1403 = vmatprep.subr.mxu0 0.0
        %1404 = vmatpush1.msra.mxu0 0.0
        %1405 = vmatprep.subr.mxu0 0.0
        %1406 = vmatpush1.msra.mxu0 0.0
        %1407 = vmatprep.subr.mxu0 0.0
        %1408 = vmatpush1.msra.mxu0 0.0
        %1409 = vmatprep.subr.mxu0 0.0
        %1410 = vmatpush1.msra.mxu0 0.0
        %1411 = vmatprep.subr.mxu0 0.0
        %1412 = vmatpush1.msra.mxu0 0.0
        %1413 = vmatprep.subr.mxu0 0.0
        %1414 = vmatpush1.msra.mxu0 0.0
        %1415 = vmatprep.subr.mxu0 0.0
        %1416 = vmatpush1.msra.mxu0 0.0
        %1417 = vmatprep.subr.mxu0 0.0
        %1418 = vmatpush1.msra.mxu0 0.0
        %1419 = vmatprep.subr.mxu0 0.0
        %1420 = vmatpush1.msra.mxu0 0.0
        %1421 = vmatprep.subr.mxu0 0.0
        %1422 = vmatpush1.msra.mxu0 0.0
        %1423 = vmatprep.subr.mxu0 0.0
        %1424 = vmatpush1.msra.mxu0 0.0
        %1425 = vmatprep.subr.mxu0 0.0
        %1426 = vmatpush1.msra.mxu0 0.0
        %1427 = vmatprep.subr.mxu0 0.0
        %1428 = vmatpush1.msra.mxu0 0.0
        %1429 = vmatprep.subr.mxu0 0.0
        %1430 = vmatpush1.msra.mxu0 0.0
        %1431 = vmatprep.subr.mxu0 0.0
        %1432 = vmatpush1.msra.mxu0 0.0
        %1433 = vmatprep.subr.mxu0 0.0
        %1434 = vmatpush1.msra.mxu0 0.0
        %1435 = vmatprep.subr.mxu0 0.0
        %1436 = vmatpush1.msra.mxu0 0.0
        %1437 = vmatprep.mubr.f32.mxu0 0.0
        %1438 = vmatmul.mubr.f32.gmra.mrb[0].mxu0 %v1371
        %v1439 = vpop.f32.mrb[0].mxu0
        %v1440 = vadd.f32 0.0, %v1439
        %v1441 = vpop.f32.mrb[0].mxu0
        %1442 = vdwg.mxu0
        %v1443 = vsel %vm650, %v584, 0
        %1445 = vmatprep.subr.mxu0 0.0
        %1446 = vmatpush1.msra.mxu0 %v630
        %1447 = vmatprep.subr.mxu0 0.0
        %1448 = vmatpush1.msra.mxu0 %v631
        %1449 = vmatprep.subr.mxu0 0.0
        %1450 = vmatpush1.msra.mxu0 %v632
        %1451 = vmatprep.subr.mxu0 0.0
        %1452 = vmatpush1.msra.mxu0 %v633
        %1453 = vmatprep.subr.mxu0 0.0
        %1454 = vmatpush1.msra.mxu0 0.0
        %1455 = vmatprep.subr.mxu0 0.0
        %1456 = vmatpush1.msra.mxu0 0.0
        %1457 = vmatprep.subr.mxu0 0.0
        %1458 = vmatpush1.msra.mxu0 0.0
        %1459 = vmatprep.subr.mxu0 0.0
        %1460 = vmatpush1.msra.mxu0 0.0
        %1461 = vmatprep.subr.mxu0 0.0
        %1462 = vmatpush1.msra.mxu0 0.0
        %1463 = vmatprep.subr.mxu0 0.0
        %1464 = vmatpush1.msra.mxu0 0.0
        %1465 = vmatprep.subr.mxu0 0.0
        %1466 = vmatpush1.msra.mxu0 0.0
        %1467 = vmatprep.subr.mxu0 0.0
        %1468 = vmatpush1.msra.mxu0 0.0
        %1469 = vmatprep.subr.mxu0 0.0
        %1470 = vmatpush1.msra.mxu0 0.0
        %1471 = vmatprep.subr.mxu0 0.0
        %1472 = vmatpush1.msra.mxu0 0.0
        %1473 = vmatprep.subr.mxu0 0.0
        %1474 = vmatpush1.msra.mxu0 0.0
        %1475 = vmatprep.subr.mxu0 0.0
        %1476 = vmatpush1.msra.mxu0 0.0
        %1477 = vmatprep.subr.mxu0 0.0
        %1478 = vmatpush1.msra.mxu0 0.0
        %1479 = vmatprep.subr.mxu0 0.0
        %1480 = vmatpush1.msra.mxu0 0.0
        %1481 = vmatprep.subr.mxu0 0.0
        %1482 = vmatpush1.msra.mxu0 0.0
        %1483 = vmatprep.subr.mxu0 0.0
        %1484 = vmatpush1.msra.mxu0 0.0
        %1485 = vmatprep.subr.mxu0 0.0
        %1486 = vmatpush1.msra.mxu0 0.0
        %1487 = vmatprep.subr.mxu0 0.0
        %1488 = vmatpush1.msra.mxu0 0.0
        %1489 = vmatprep.subr.mxu0 0.0
        %1490 = vmatpush1.msra.mxu0 0.0
        %1491 = vmatprep.subr.mxu0 0.0
        %1492 = vmatpush1.msra.mxu0 0.0
        %1493 = vmatprep.subr.mxu0 0.0
        %1494 = vmatpush1.msra.mxu0 0.0
        %1495 = vmatprep.subr.mxu0 0.0
        %1496 = vmatpush1.msra.mxu0 0.0
        %1497 = vmatprep.subr.mxu0 0.0
        %1498 = vmatpush1.msra.mxu0 0.0
        %1499 = vmatprep.subr.mxu0 0.0
        %1500 = vmatpush1.msra.mxu0 0.0
        %1501 = vmatprep.subr.mxu0 0.0
        %1502 = vmatpush1.msra.mxu0 0.0
        %1503 = vmatprep.subr.mxu0 0.0
        %1504 = vmatpush1.msra.mxu0 0.0
        %1505 = vmatprep.subr.mxu0 0.0
        %1506 = vmatpush1.msra.mxu0 0.0
        %1507 = vmatprep.subr.mxu0 0.0
        %1508 = vmatpush1.msra.mxu0 0.0
        %1509 = vmatprep.mubr.f32.mxu0 0.0
        %1510 = vmatmul.mubr.f32.gmra.mrb[0].mxu0 %v1443
        %v1511 = vpop.f32.mrb[0].mxu0
        %v1512 = vadd.f32 0.0, %v1511
        %v1513 = vpop.f32.mrb[0].mxu0
        %1514 = vdwg.mxu0
        %v1515 = vsel %vm650, %v567, 0
        %1517 = vmatprep.subr.mxu0 0.0
        %1518 = vmatpush1.msra.mxu0 %v634
        %1519 = vmatprep.subr.mxu0 0.0
        %1520 = vmatpush1.msra.mxu0 %v635
        %1521 = vmatprep.subr.mxu0 0.0
        %1522 = vmatpush1.msra.mxu0 %v636
        %1523 = vmatprep.subr.mxu0 0.0
        %1524 = vmatpush1.msra.mxu0 %v637
        %1525 = vmatprep.subr.mxu0 0.0
        %1526 = vmatpush1.msra.mxu0 0.0
        %1527 = vmatprep.subr.mxu0 0.0
        %1528 = vmatpush1.msra.mxu0 0.0
        %1529 = vmatprep.subr.mxu0 0.0
        %1530 = vmatpush1.msra.mxu0 0.0
        %1531 = vmatprep.subr.mxu0 0.0
        %1532 = vmatpush1.msra.mxu0 0.0
        %1533 = vmatprep.subr.mxu0 0.0
        %1534 = vmatpush1.msra.mxu0 0.0
        %1535 = vmatprep.subr.mxu0 0.0
        %1536 = vmatpush1.msra.mxu0 0.0
        %1537 = vmatprep.subr.mxu0 0.0
        %1538 = vmatpush1.msra.mxu0 0.0
        %1539 = vmatprep.subr.mxu0 0.0
        %1540 = vmatpush1.msra.mxu0 0.0
        %1541 = vmatprep.subr.mxu0 0.0
        %1542 = vmatpush1.msra.mxu0 0.0
        %1543 = vmatprep.subr.mxu0 0.0
        %1544 = vmatpush1.msra.mxu0 0.0
        %1545 = vmatprep.subr.mxu0 0.0
        %1546 = vmatpush1.msra.mxu0 0.0
        %1547 = vmatprep.subr.mxu0 0.0
        %1548 = vmatpush1.msra.mxu0 0.0
        %1549 = vmatprep.subr.mxu0 0.0
        %1550 = vmatpush1.msra.mxu0 0.0
        %1551 = vmatprep.subr.mxu0 0.0
        %1552 = vmatpush1.msra.mxu0 0.0
        %1553 = vmatprep.subr.mxu0 0.0
        %1554 = vmatpush1.msra.mxu0 0.0
        %1555 = vmatprep.subr.mxu0 0.0
        %1556 = vmatpush1.msra.mxu0 0.0
        %1557 = vmatprep.subr.mxu0 0.0
        %1558 = vmatpush1.msra.mxu0 0.0
        %1559 = vmatprep.subr.mxu0 0.0
        %1560 = vmatpush1.msra.mxu0 0.0
        %1561 = vmatprep.subr.mxu0 0.0
        %1562 = vmatpush1.msra.mxu0 0.0
        %1563 = vmatprep.subr.mxu0 0.0
        %1564 = vmatpush1.msra.mxu0 0.0
        %1565 = vmatprep.subr.mxu0 0.0
        %1566 = vmatpush1.msra.mxu0 0.0
        %1567 = vmatprep.subr.mxu0 0.0
        %1568 = vmatpush1.msra.mxu0 0.0
        %1569 = vmatprep.subr.mxu0 0.0
        %1570 = vmatpush1.msra.mxu0 0.0
        %1571 = vmatprep.subr.mxu0 0.0
        %1572 = vmatpush1.msra.mxu0 0.0
        %1573 = vmatprep.subr.mxu0 0.0
        %1574 = vmatpush1.msra.mxu0 0.0
        %1575 = vmatprep.subr.mxu0 0.0
        %1576 = vmatpush1.msra.mxu0 0.0
        %1577 = vmatprep.subr.mxu0 0.0
        %1578 = vmatpush1.msra.mxu0 0.0
        %1579 = vmatprep.subr.mxu0 0.0
        %1580 = vmatpush1.msra.mxu0 0.0
        %1581 = vmatprep.mubr.f32.mxu0 0.0
        %1582 = vmatmul.mubr.f32.gmra.mrb[0].mxu0 %v1515
        %v1583 = vpop.f32.mrb[0].mxu0
        %v1584 = vadd.f32 0.0, %v1583
        %v1585 = vpop.f32.mrb[0].mxu0
        %1586 = vdwg.mxu0
        %v1587 = vsel %vm650, %v581, 0
        %1589 = vmatprep.subr.mxu0 0.0
        %1590 = vmatpush1.msra.mxu0 %v638
        %1591 = vmatprep.subr.mxu0 0.0
        %1592 = vmatpush1.msra.mxu0 %v639
        %1593 = vmatprep.subr.mxu0 0.0
        %1594 = vmatpush1.msra.mxu0 %v640
        %1595 = vmatprep.subr.mxu0 0.0
        %1596 = vmatpush1.msra.mxu0 %v641
        %1597 = vmatprep.subr.mxu0 0.0
        %1598 = vmatpush1.msra.mxu0 0.0
        %1599 = vmatprep.subr.mxu0 0.0
        %1600 = vmatpush1.msra.mxu0 0.0
        %1601 = vmatprep.subr.mxu0 0.0
        %1602 = vmatpush1.msra.mxu0 0.0
        %1603 = vmatprep.subr.mxu0 0.0
        %1604 = vmatpush1.msra.mxu0 0.0
        %1605 = vmatprep.subr.mxu0 0.0
        %1606 = vmatpush1.msra.mxu0 0.0
        %1607 = vmatprep.subr.mxu0 0.0
        %1608 = vmatpush1.msra.mxu0 0.0
        %1609 = vmatprep.subr.mxu0 0.0
        %1610 = vmatpush1.msra.mxu0 0.0
        %1611 = vmatprep.subr.mxu0 0.0
        %1612 = vmatpush1.msra.mxu0 0.0
        %1613 = vmatprep.subr.mxu0 0.0
        %1614 = vmatpush1.msra.mxu0 0.0
        %1615 = vmatprep.subr.mxu0 0.0
        %1616 = vmatpush1.msra.mxu0 0.0
        %1617 = vmatprep.subr.mxu0 0.0
        %1618 = vmatpush1.msra.mxu0 0.0
        %1619 = vmatprep.subr.mxu0 0.0
        %1620 = vmatpush1.msra.mxu0 0.0
        %1621 = vmatprep.subr.mxu0 0.0
        %1622 = vmatpush1.msra.mxu0 0.0
        %1623 = vmatprep.subr.mxu0 0.0
        %1624 = vmatpush1.msra.mxu0 0.0
        %1625 = vmatprep.subr.mxu0 0.0
        %1626 = vmatpush1.msra.mxu0 0.0
        %1627 = vmatprep.subr.mxu0 0.0
        %1628 = vmatpush1.msra.mxu0 0.0
        %1629 = vmatprep.subr.mxu0 0.0
        %1630 = vmatpush1.msra.mxu0 0.0
        %1631 = vmatprep.subr.mxu0 0.0
        %1632 = vmatpush1.msra.mxu0 0.0
        %1633 = vmatprep.subr.mxu0 0.0
        %1634 = vmatpush1.msra.mxu0 0.0
        %1635 = vmatprep.subr.mxu0 0.0
        %1636 = vmatpush1.msra.mxu0 0.0
        %1637 = vmatprep.subr.mxu0 0.0
        %1638 = vmatpush1.msra.mxu0 0.0
        %1639 = vmatprep.subr.mxu0 0.0
        %1640 = vmatpush1.msra.mxu0 0.0
        %1641 = vmatprep.subr.mxu0 0.0
        %1642 = vmatpush1.msra.mxu0 0.0
        %1643 = vmatprep.subr.mxu0 0.0
        %1644 = vmatpush1.msra.mxu0 0.0
        %1645 = vmatprep.subr.mxu0 0.0
        %1646 = vmatpush1.msra.mxu0 0.0
        %1647 = vmatprep.subr.mxu0 0.0
        %1648 = vmatpush1.msra.mxu0 0.0
        %1649 = vmatprep.subr.mxu0 0.0
        %1650 = vmatpush1.msra.mxu0 0.0
        %1651 = vmatprep.subr.mxu0 0.0
        %1652 = vmatpush1.msra.mxu0 0.0
        %1653 = vmatprep.mubr.f32.mxu0 0.0
        %1654 = vmatmul.mubr.f32.gmra.mrb[0].mxu0 %v1587
        %v1655 = vpop.f32.mrb[0].mxu0
        %v1656 = vadd.f32 0.0, %v1655
        %v1657 = vpop.f32.mrb[0].mxu0
        %1658 = vdwg.mxu0
        %v1659 = vsel %vm650, %v583, 0
        %1661 = vmatprep.subr.mxu0 0.0
        %1662 = vmatpush1.msra.mxu0 %v642
        %1663 = vmatprep.subr.mxu0 0.0
        %1664 = vmatpush1.msra.mxu0 %v643
        %1665 = vmatprep.subr.mxu0 0.0
        %1666 = vmatpush1.msra.mxu0 %v644
        %1667 = vmatprep.subr.mxu0 0.0
        %1668 = vmatpush1.msra.mxu0 %v645
        %1669 = vmatprep.subr.mxu0 0.0
        %1670 = vmatpush1.msra.mxu0 0.0
        %1671 = vmatprep.subr.mxu0 0.0
        %1672 = vmatpush1.msra.mxu0 0.0
        %1673 = vmatprep.subr.mxu0 0.0
        %1674 = vmatpush1.msra.mxu0 0.0
        %1675 = vmatprep.subr.mxu0 0.0
        %1676 = vmatpush1.msra.mxu0 0.0
        %1677 = vmatprep.subr.mxu0 0.0
        %1678 = vmatpush1.msra.mxu0 0.0
        %1679 = vmatprep.subr.mxu0 0.0
        %1680 = vmatpush1.msra.mxu0 0.0
        %1681 = vmatprep.subr.mxu0 0.0
        %1682 = vmatpush1.msra.mxu0 0.0
        %1683 = vmatprep.subr.mxu0 0.0
        %1684 = vmatpush1.msra.mxu0 0.0
        %1685 = vmatprep.subr.mxu0 0.0
        %1686 = vmatpush1.msra.mxu0 0.0
        %1687 = vmatprep.subr.mxu0 0.0
        %1688 = vmatpush1.msra.mxu0 0.0
        %1689 = vmatprep.subr.mxu0 0.0
        %1690 = vmatpush1.msra.mxu0 0.0
        %1691 = vmatprep.subr.mxu0 0.0
        %1692 = vmatpush1.msra.mxu0 0.0
        %1693 = vmatprep.subr.mxu0 0.0
        %1694 = vmatpush1.msra.mxu0 0.0
        %1695 = vmatprep.subr.mxu0 0.0
        %1696 = vmatpush1.msra.mxu0 0.0
        %1697 = vmatprep.subr.mxu0 0.0
        %1698 = vmatpush1.msra.mxu0 0.0
        %1699 = vmatprep.subr.mxu0 0.0
        %1700 = vmatpush1.msra.mxu0 0.0
        %1701 = vmatprep.subr.mxu0 0.0
        %1702 = vmatpush1.msra.mxu0 0.0
        %1703 = vmatprep.subr.mxu0 0.0
        %1704 = vmatpush1.msra.mxu0 0.0
        %1705 = vmatprep.subr.mxu0 0.0
        %1706 = vmatpush1.msra.mxu0 0.0
        %1707 = vmatprep.subr.mxu0 0.0
        %1708 = vmatpush1.msra.mxu0 0.0
        %1709 = vmatprep.subr.mxu0 0.0
        %1710 = vmatpush1.msra.mxu0 0.0
        %1711 = vmatprep.subr.mxu0 0.0
        %1712 = vmatpush1.msra.mxu0 0.0
        %1713 = vmatprep.subr.mxu0 0.0
        %1714 = vmatpush1.msra.mxu0 0.0
        %1715 = vmatprep.subr.mxu0 0.0
        %1716 = vmatpush1.msra.mxu0 0.0
        %1717 = vmatprep.subr.mxu0 0.0
        %1718 = vmatpush1.msra.mxu0 0.0
        %1719 = vmatprep.subr.mxu0 0.0
        %1720 = vmatpush1.msra.mxu0 0.0
        %1721 = vmatprep.subr.mxu0 0.0
        %1722 = vmatpush1.msra.mxu0 0.0
        %1723 = vmatprep.subr.mxu0 0.0
        %1724 = vmatpush1.msra.mxu0 0.0
        %1725 = vmatprep.mubr.f32.mxu0 0.0
        %1726 = vmatmul.mubr.f32.gmra.mrb[0].mxu0 %v1659
        %v1727 = vpop.f32.mrb[0].mxu0
        %v1728 = vadd.f32 0.0, %v1727
        %v1729 = vpop.f32.mrb[0].mxu0
        %1730 = vdwg.mxu0
        %v1731 = vsel %vm650, %v585, 0
        %1733 = vmatprep.subr.mxu0 0.0
        %1734 = vmatpush1.msra.mxu0 %v646
        %1735 = vmatprep.subr.mxu0 0.0
        %1736 = vmatpush1.msra.mxu0 %v647
        %1737 = vmatprep.subr.mxu0 0.0
        %1738 = vmatpush1.msra.mxu0 %v648
        %1739 = vmatprep.subr.mxu0 0.0
        %1740 = vmatpush1.msra.mxu0 %v649
        %1741 = vmatprep.subr.mxu0 0.0
        %1742 = vmatpush1.msra.mxu0 0.0
        %1743 = vmatprep.subr.mxu0 0.0
        %1744 = vmatpush1.msra.mxu0 0.0
        %1745 = vmatprep.subr.mxu0 0.0
        %1746 = vmatpush1.msra.mxu0 0.0
        %1747 = vmatprep.subr.mxu0 0.0
        %1748 = vmatpush1.msra.mxu0 0.0
        %1749 = vmatprep.subr.mxu0 0.0
        %1750 = vmatpush1.msra.mxu0 0.0
        %1751 = vmatprep.subr.mxu0 0.0
        %1752 = vmatpush1.msra.mxu0 0.0
        %1753 = vmatprep.subr.mxu0 0.0
        %1754 = vmatpush1.msra.mxu0 0.0
        %1755 = vmatprep.subr.mxu0 0.0
        %1756 = vmatpush1.msra.mxu0 0.0
        %1757 = vmatprep.subr.mxu0 0.0
        %1758 = vmatpush1.msra.mxu0 0.0
        %1759 = vmatprep.subr.mxu0 0.0
        %1760 = vmatpush1.msra.mxu0 0.0
        %1761 = vmatprep.subr.mxu0 0.0
        %1762 = vmatpush1.msra.mxu0 0.0
        %1763 = vmatprep.subr.mxu0 0.0
        %1764 = vmatpush1.msra.mxu0 0.0
        %1765 = vmatprep.subr.mxu0 0.0
        %1766 = vmatpush1.msra.mxu0 0.0
        %1767 = vmatprep.subr.mxu0 0.0
        %1768 = vmatpush1.msra.mxu0 0.0
        %1769 = vmatprep.subr.mxu0 0.0
        %1770 = vmatpush1.msra.mxu0 0.0
        %1771 = vmatprep.subr.mxu0 0.0
        %1772 = vmatpush1.msra.mxu0 0.0
        %1773 = vmatprep.subr.mxu0 0.0
        %1774 = vmatpush1.msra.mxu0 0.0
        %1775 = vmatprep.subr.mxu0 0.0
        %1776 = vmatpush1.msra.mxu0 0.0
        %1777 = vmatprep.subr.mxu0 0.0
        %1778 = vmatpush1.msra.mxu0 0.0
        %1779 = vmatprep.subr.mxu0 0.0
        %1780 = vmatpush1.msra.mxu0 0.0
        %1781 = vmatprep.subr.mxu0 0.0
        %1782 = vmatpush1.msra.mxu0 0.0
        %1783 = vmatprep.subr.mxu0 0.0
        %1784 = vmatpush1.msra.mxu0 0.0
        %1785 = vmatprep.subr.mxu0 0.0
        %1786 = vmatpush1.msra.mxu0 0.0
        %1787 = vmatprep.subr.mxu0 0.0
        %1788 = vmatpush1.msra.mxu0 0.0
        %1789 = vmatprep.subr.mxu0 0.0
        %1790 = vmatpush1.msra.mxu0 0.0
        %1791 = vmatprep.subr.mxu0 0.0
        %1792 = vmatpush1.msra.mxu0 0.0
        %1793 = vmatprep.subr.mxu0 0.0
        %1794 = vmatpush1.msra.mxu0 0.0
        %1795 = vmatprep.subr.mxu0 0.0
        %1796 = vmatpush1.msra.mxu0 0.0
        %1797 = vmatprep.mubr.f32.mxu0 0.0
        %1798 = vmatmul.mubr.f32.gmra.mrb[0].mxu0 %v1731
        %v1799 = vpop.f32.mrb[0].mxu0
        %v1800 = vadd.f32 0.0, %v1799
        %v1801 = vpop.f32.mrb[0].mxu0
        %1802 = vdwg.mxu0
        %v1803 = vld [vmem:[%s3] sm:$0xff]
        %v1804 = vld [vmem:[%s3 + $0x8] sm:$0xff]
        %v1805 = vld [vmem:[%s3 + $0x10] sm:$0xff]
        %v1806 = vld [vmem:[%s3 + $0x18] sm:$0xff]
        %v1823 = vrot.slane %v792, 7
        %vm1824 = vcmask 1041409
        %v1825 = vsel %vm1824, %v1823, %v720
        %v1826 = vrot.slane %v864, 6
        %vm1827 = vcmask 1042434
        %v1828 = vsel %vm1827, %v1826, %v1825
        %v1829 = vrot.slane %v936, 5
        %vm1830 = vcmask 1043459
        %v1831 = vsel %vm1830, %v1829, %v1828
        %v1832 = vrot.slane %v1008, 4
        %vm1833 = vcmask 1044484
        %v1834 = vsel %vm1833, %v1832, %v1831
        %v1835 = vrot.slane %v1080, 3
        %vm1836 = vcmask 1045509
        %v1837 = vsel %vm1836, %v1835, %v1834
        %v1838 = vrot.slane %v1152, 2
        %vm1839 = vcmask 1046534
        %v1840 = vsel %vm1839, %v1838, %v1837
        %v1841 = vrot.slane %v1224, 1
        %vm1842 = vcmask 1047559
        %v1843 = vsel %vm1842, %v1841, %v1840
        %v1844 = vrot.slane %v1368, 7
        %v1845 = vsel %vm1824, %v1844, %v1296
        %v1846 = vrot.slane %v1440, 6
        %v1847 = vsel %vm1827, %v1846, %v1845
        %v1848 = vrot.slane %v1512, 5
        %v1849 = vsel %vm1830, %v1848, %v1847
        %v1850 = vrot.slane %v1584, 4
        %v1851 = vsel %vm1833, %v1850, %v1849
        %v1852 = vrot.slane %v1656, 3
        %v1853 = vsel %vm1836, %v1852, %v1851
        %v1854 = vrot.slane %v1728, 2
        %v1855 = vsel %vm1839, %v1854, %v1853
        %v1856 = vrot.slane %v1800, 1
        %v1857 = vsel %vm1842, %v1856, %v1855
        %v1858 = vsel %vm650, %v1843, 0
        %v1860 = vsel %vm650, %v1857, 0
        %1862 = vmatprep.subr.mxu0 0.0
        %1863 = vmatpush1.msra.mxu0 %v1803
        %1864 = vmatprep.subr.mxu0 0.0
        %1865 = vmatpush1.msra.mxu0 %v1804
        %1866 = vmatprep.subr.mxu0 0.0
        %1867 = vmatpush1.msra.mxu0 %v1805
        %1868 = vmatprep.subr.mxu0 0.0
        %1869 = vmatpush1.msra.mxu0 %v1806
        %1870 = vmatprep.subr.mxu0 0.0
        %1871 = vmatpush1.msra.mxu0 0.0
        %1872 = vmatprep.subr.mxu0 0.0
        %1873 = vmatpush1.msra.mxu0 0.0
        %1874 = vmatprep.subr.mxu0 0.0
        %1875 = vmatpush1.msra.mxu0 0.0
        %1876 = vmatprep.subr.mxu0 0.0
        %1877 = vmatpush1.msra.mxu0 0.0
        %1878 = vmatprep.subr.mxu0 0.0
        %1879 = vmatpush1.msra.mxu0 0.0
        %1880 = vmatprep.subr.mxu0 0.0
        %1881 = vmatpush1.msra.mxu0 0.0
        %1882 = vmatprep.subr.mxu0 0.0
        %1883 = vmatpush1.msra.mxu0 0.0
        %1884 = vmatprep.subr.mxu0 0.0
        %1885 = vmatpush1.msra.mxu0 0.0
        %1886 = vmatprep.subr.mxu0 0.0
        %1887 = vmatpush1.msra.mxu0 0.0
        %1888 = vmatprep.subr.mxu0 0.0
        %1889 = vmatpush1.msra.mxu0 0.0
        %1890 = vmatprep.subr.mxu0 0.0
        %1891 = vmatpush1.msra.mxu0 0.0
        %1892 = vmatprep.subr.mxu0 0.0
        %1893 = vmatpush1.msra.mxu0 0.0
        %1894 = vmatprep.subr.mxu0 0.0
        %1895 = vmatpush1.msra.mxu0 0.0
        %1896 = vmatprep.subr.mxu0 0.0
        %1897 = vmatpush1.msra.mxu0 0.0
        %1898 = vmatprep.subr.mxu0 0.0
        %1899 = vmatpush1.msra.mxu0 0.0
        %1900 = vmatprep.subr.mxu0 0.0
        %1901 = vmatpush1.msra.mxu0 0.0
        %1902 = vmatprep.subr.mxu0 0.0
        %1903 = vmatpush1.msra.mxu0 0.0
        %1904 = vmatprep.subr.mxu0 0.0
        %1905 = vmatpush1.msra.mxu0 0.0
        %1906 = vmatprep.subr.mxu0 0.0
        %1907 = vmatpush1.msra.mxu0 0.0
        %1908 = vmatprep.subr.mxu0 0.0
        %1909 = vmatpush1.msra.mxu0 0.0
        %1910 = vmatprep.subr.mxu0 0.0
        %1911 = vmatpush1.msra.mxu0 0.0
        %1912 = vmatprep.subr.mxu0 0.0
        %1913 = vmatpush1.msra.mxu0 0.0
        %1914 = vmatprep.subr.mxu0 0.0
        %1915 = vmatpush1.msra.mxu0 0.0
        %1916 = vmatprep.subr.mxu0 0.0
        %1917 = vmatpush1.msra.mxu0 0.0
        %1918 = vmatprep.subr.mxu0 0.0
        %1919 = vmatpush1.msra.mxu0 0.0
        %1920 = vmatprep.subr.mxu0 0.0
        %1921 = vmatpush1.msra.mxu0 0.0
        %1922 = vmatprep.subr.mxu0 0.0
        %1923 = vmatpush1.msra.mxu0 0.0
        %1924 = vmatprep.subr.mxu0 0.0
        %1925 = vmatpush1.msra.mxu0 0.0
        %1926 = vmatprep.mubr.f32.mxu0 0.0
        %1927 = vmatmul.mubr.f32.gmra.mrb[0].mxu0 %v1858
        %v1928 = vpop.f32.mrb[0].mxu0
        %v1929 = vadd.f32 0.0, %v1928
        %v1930 = vpop.f32.mrb[0].mxu0
        %1931 = vmatprep.mubr.f32.mxu0 0.0
        %1932 = vmatmul.mubr.f32.gmra.mrb[0].mxu0 %v1860
        %v1933 = vpop.f32.mrb[0].mxu0
        %v1934 = vadd.f32 0.0, %v1933
        %v1935 = vpop.f32.mrb[0].mxu0
        %1936 = vdwg.mxu0
        %v1937 = vld [vmem:[%s4] sm:$0xff]
        %v1938 = vld [vmem:[%s4 + $0x8] sm:$0xff]
        %v1939 = vld [vmem:[%s4 + $0x10] sm:$0xff]
        %v1940 = vld [vmem:[%s4 + $0x18] sm:$0xff]
        %1941 = vmatprep.subr.mxu0 0.0
        %1942 = vmatpush1.msra.mxu0 %v1937
        %1943 = vmatprep.subr.mxu0 0.0
        %1944 = vmatpush1.msra.mxu0 %v1938
        %1945 = vmatprep.subr.mxu0 0.0
        %1946 = vmatpush1.msra.mxu0 %v1939
        %1947 = vmatprep.subr.mxu0 0.0
        %1948 = vmatpush1.msra.mxu0 %v1940
        %1949 = vmatprep.subr.mxu0 0.0
        %1950 = vmatpush1.msra.mxu0 0.0
        %1951 = vmatprep.subr.mxu0 0.0
        %1952 = vmatpush1.msra.mxu0 0.0
        %1953 = vmatprep.subr.mxu0 0.0
        %1954 = vmatpush1.msra.mxu0 0.0
        %1955 = vmatprep.subr.mxu0 0.0
        %1956 = vmatpush1.msra.mxu0 0.0
        %1957 = vmatprep.subr.mxu0 0.0
        %1958 = vmatpush1.msra.mxu0 0.0
        %1959 = vmatprep.subr.mxu0 0.0
        %1960 = vmatpush1.msra.mxu0 0.0
        %1961 = vmatprep.subr.mxu0 0.0
        %1962 = vmatpush1.msra.mxu0 0.0
        %1963 = vmatprep.subr.mxu0 0.0
        %1964 = vmatpush1.msra.mxu0 0.0
        %1965 = vmatprep.subr.mxu0 0.0
        %1966 = vmatpush1.msra.mxu0 0.0
        %1967 = vmatprep.subr.mxu0 0.0
        %1968 = vmatpush1.msra.mxu0 0.0
        %1969 = vmatprep.subr.mxu0 0.0
        %1970 = vmatpush1.msra.mxu0 0.0
        %1971 = vmatprep.subr.mxu0 0.0
        %1972 = vmatpush1.msra.mxu0 0.0
        %1973 = vmatprep.subr.mxu0 0.0
        %1974 = vmatpush1.msra.mxu0 0.0
        %1975 = vmatprep.subr.mxu0 0.0
        %1976 = vmatpush1.msra.mxu0 0.0
        %1977 = vmatprep.subr.mxu0 0.0
        %1978 = vmatpush1.msra.mxu0 0.0
        %1979 = vmatprep.subr.mxu0 0.0
        %1980 = vmatpush1.msra.mxu0 0.0
        %1981 = vmatprep.subr.mxu0 0.0
        %1982 = vmatpush1.msra.mxu0 0.0
        %1983 = vmatprep.subr.mxu0 0.0
        %1984 = vmatpush1.msra.mxu0 0.0
        %1985 = vmatprep.subr.mxu0 0.0
        %1986 = vmatpush1.msra.mxu0 0.0
        %1987 = vmatprep.subr.mxu0 0.0
        %1988 = vmatpush1.msra.mxu0 0.0
        %1989 = vmatprep.subr.mxu0 0.0
        %1990 = vmatpush1.msra.mxu0 0.0
        %1991 = vmatprep.subr.mxu0 0.0
        %1992 = vmatpush1.msra.mxu0 0.0
        %1993 = vmatprep.subr.mxu0 0.0
        %1994 = vmatpush1.msra.mxu0 0.0
        %1995 = vmatprep.subr.mxu0 0.0
        %1996 = vmatpush1.msra.mxu0 0.0
        %1997 = vmatprep.subr.mxu0 0.0
        %1998 = vmatpush1.msra.mxu0 0.0
        %1999 = vmatprep.subr.mxu0 0.0
        %2000 = vmatpush1.msra.mxu0 0.0
        %2001 = vmatprep.subr.mxu0 0.0
        %2002 = vmatpush1.msra.mxu0 0.0
        %2003 = vmatprep.subr.mxu0 0.0
        %2004 = vmatpush1.msra.mxu0 0.0
        %2005 = vmatprep.mubr.f32.mxu0 0.0
        %2006 = vmatmul.mubr.f32.gmra.mrb[0].mxu0 %v1858
        %v2007 = vpop.f32.mrb[0].mxu0
        %v2008 = vadd.f32 0.0, %v2007
        %v2009 = vpop.f32.mrb[0].mxu0
        %2010 = vmatprep.mubr.f32.mxu0 0.0
        %2011 = vmatmul.mubr.f32.gmra.mrb[0].mxu0 %v1860
        %v2012 = vpop.f32.mrb[0].mxu0
        %v2013 = vadd.f32 0.0, %v2012
        %v2014 = vpop.f32.mrb[0].mxu0
        %2015 = vdwg.mxu0
        %v2016 = vld [vmem:[#allocation2] sm:$0xff]
        %v2017 = vld [vmem:[#allocation2 + $0x8] sm:$0xff]
        %v2018 = vld [vmem:[%s386] sm:$0xff]
        %v2019 = vld [vmem:[%s386 + $0x8] sm:$0xff]
        %v2020 = vld [vmem:[%s392] sm:$0xff]
        %v2021 = vld [vmem:[%s392 + $0x8] sm:$0xff]
        %2022 = vxpose.xlu0.b32.start [1/16] %v2020, 128
        %2023 = vxpose.xlu0.b32.cont [2/16] %v2021, 128
        %2024 = vxpose.xlu0.b32.cont [3/16] 0.0, 128
        %2025 = vxpose.xlu0.b32.cont [4/16] 0.0, 128
        %2026 = vxpose.xlu0.b32.cont [5/16] 0.0, 128
        %2027 = vxpose.xlu0.b32.cont [6/16] 0.0, 128
        %2028 = vxpose.xlu0.b32.cont [7/16] 0.0, 128
        %2029 = vxpose.xlu0.b32.cont [8/16] 0.0, 128
        %2030 = vxpose.xlu0.b32.cont [9/16] 0.0, 128
        %2031 = vxpose.xlu0.b32.cont [10/16] 0.0, 128
        %2032 = vxpose.xlu0.b32.cont [11/16] 0.0, 128
        %2033 = vxpose.xlu0.b32.cont [12/16] 0.0, 128
        %2034 = vxpose.xlu0.b32.cont [13/16] 0.0, 128
        %2035 = vxpose.xlu0.b32.cont [14/16] 0.0, 128
        %2036 = vxpose.xlu0.b32.cont [15/16] 0.0, 128
        %2037 = vxpose.xlu0.b32.end [16/16] 0.0, 128
        %v2038 = vpop.trf.xlu0
        %v2039 = vpop.trf.xlu0
        %v2040 = vpop.trf.xlu0
        %v2041 = vpop.trf.xlu0
        %v2042 = vpop.trf.xlu0
        %v2043 = vpop.trf.xlu0
        %v2044 = vpop.trf.xlu0
        %v2045 = vpop.trf.xlu0
        %v2046 = vpop.trf.xlu0
        %v2047 = vpop.trf.xlu0
        %v2048 = vpop.trf.xlu0
        %v2049 = vpop.trf.xlu0
        %v2050 = vpop.trf.xlu0
        %v2051 = vpop.trf.xlu0
        %v2052 = vpop.trf.xlu0
        %v2053 = vpop.trf.xlu0
        %vm2054 = vcmask 130048
        %v2056 = vsel %vm2054, %v2038, 0
        %v2059 = vsel %vm2054, %v2039, 0
        %2061 = vmatprep.subr.mxu0 0.0
        %2062 = vmatpush1.msra.mxu0 %v2008
        %2063 = vmatprep.subr.mxu0 0.0
        %2064 = vmatpush1.msra.mxu0 %v2013
        %2065 = vmatprep.subr.mxu0 0.0
        %2066 = vmatpush1.msra.mxu0 0.0
        %2067 = vmatprep.subr.mxu0 0.0
        %2068 = vmatpush1.msra.mxu0 0.0
        %2069 = vmatprep.subr.mxu0 0.0
        %2070 = vmatpush1.msra.mxu0 0.0
        %2071 = vmatprep.subr.mxu0 0.0
        %2072 = vmatpush1.msra.mxu0 0.0
        %2073 = vmatprep.subr.mxu0 0.0
        %2074 = vmatpush1.msra.mxu0 0.0
        %2075 = vmatprep.subr.mxu0 0.0
        %2076 = vmatpush1.msra.mxu0 0.0
        %2077 = vmatprep.subr.mxu0 0.0
        %2078 = vmatpush1.msra.mxu0 0.0
        %2079 = vmatprep.subr.mxu0 0.0
        %2080 = vmatpush1.msra.mxu0 0.0
        %2081 = vmatprep.subr.mxu0 0.0
        %2082 = vmatpush1.msra.mxu0 0.0
        %2083 = vmatprep.subr.mxu0 0.0
        %2084 = vmatpush1.msra.mxu0 0.0
        %2085 = vmatprep.subr.mxu0 0.0
        %2086 = vmatpush1.msra.mxu0 0.0
        %2087 = vmatprep.subr.mxu0 0.0
        %2088 = vmatpush1.msra.mxu0 0.0
        %2089 = vmatprep.subr.mxu0 0.0
        %2090 = vmatpush1.msra.mxu0 0.0
        %2091 = vmatprep.subr.mxu0 0.0
        %2092 = vmatpush1.msra.mxu0 0.0
        %2093 = vmatprep.subr.mxu0 0.0
        %2094 = vmatpush1.msra.mxu0 0.0
        %2095 = vmatprep.subr.mxu0 0.0
        %2096 = vmatpush1.msra.mxu0 0.0
        %2097 = vmatprep.subr.mxu0 0.0
        %2098 = vmatpush1.msra.mxu0 0.0
        %2099 = vmatprep.subr.mxu0 0.0
        %2100 = vmatpush1.msra.mxu0 0.0
        %2101 = vmatprep.subr.mxu0 0.0
        %2102 = vmatpush1.msra.mxu0 0.0
        %2103 = vmatprep.subr.mxu0 0.0
        %2104 = vmatpush1.msra.mxu0 0.0
        %2105 = vmatprep.subr.mxu0 0.0
        %2106 = vmatpush1.msra.mxu0 0.0
        %2107 = vmatprep.subr.mxu0 0.0
        %2108 = vmatpush1.msra.mxu0 0.0
        %2109 = vmatprep.subr.mxu0 0.0
        %2110 = vmatpush1.msra.mxu0 0.0
        %2111 = vmatprep.subr.mxu0 0.0
        %2112 = vmatpush1.msra.mxu0 0.0
        %2113 = vmatprep.subr.mxu0 0.0
        %2114 = vmatpush1.msra.mxu0 0.0
        %2115 = vmatprep.subr.mxu0 0.0
        %2116 = vmatpush1.msra.mxu0 0.0
        %2117 = vmatprep.subr.mxu0 0.0
        %2118 = vmatpush1.msra.mxu0 0.0
        %2119 = vmatprep.subr.mxu0 0.0
        %2120 = vmatpush1.msra.mxu0 0.0
        %2121 = vmatprep.subr.mxu0 0.0
        %2122 = vmatpush1.msra.mxu0 0.0
        %2123 = vmatprep.subr.mxu0 0.0
        %2124 = vmatpush1.msra.mxu0 0.0
        %2125 = vmatprep.mubr.f32.mxu0 0.0
        %2126 = vmatmul.mubr.f32.gmra.mrb[0].mxu0 %v2056
        %v2127 = vpop.f32.mrb[0].mxu0
        %v2128 = vadd.f32 0.0, %v2127
        %v2129 = vpop.f32.mrb[0].mxu0
        %2130 = vmatprep.mubr.f32.mxu0 0.0
        %2131 = vmatmul.mubr.f32.gmra.mrb[0].mxu0 %v2059
        %v2132 = vpop.f32.mrb[0].mxu0
        %v2133 = vadd.f32 0.0, %v2132
        %v2134 = vpop.f32.mrb[0].mxu0
        %2135 = vdwg.mxu0
        %2136 = vxpose.xlu0.b32.start [1/16] %v2018, 128
        %2137 = vxpose.xlu0.b32.cont [2/16] %v2019, 128
        %2138 = vxpose.xlu0.b32.cont [3/16] 0.0, 128
        %2139 = vxpose.xlu0.b32.cont [4/16] 0.0, 128
        %2140 = vxpose.xlu0.b32.cont [5/16] 0.0, 128
        %2141 = vxpose.xlu0.b32.cont [6/16] 0.0, 128
        %2142 = vxpose.xlu0.b32.cont [7/16] 0.0, 128
        %2143 = vxpose.xlu0.b32.cont [8/16] 0.0, 128
        %2144 = vxpose.xlu0.b32.cont [9/16] 0.0, 128
        %2145 = vxpose.xlu0.b32.cont [10/16] 0.0, 128
        %2146 = vxpose.xlu0.b32.cont [11/16] 0.0, 128
        %2147 = vxpose.xlu0.b32.cont [12/16] 0.0, 128
        %2148 = vxpose.xlu0.b32.cont [13/16] 0.0, 128
        %2149 = vxpose.xlu0.b32.cont [14/16] 0.0, 128
        %2150 = vxpose.xlu0.b32.cont [15/16] 0.0, 128
        %2151 = vxpose.xlu0.b32.end [16/16] 0.0, 128
        %v2152 = vpop.trf.xlu0
        %v2153 = vpop.trf.xlu0
        %v2154 = vpop.trf.xlu0
        %v2155 = vpop.trf.xlu0
        %v2156 = vpop.trf.xlu0
        %v2157 = vpop.trf.xlu0
        %v2158 = vpop.trf.xlu0
        %v2159 = vpop.trf.xlu0
        %v2160 = vpop.trf.xlu0
        %v2161 = vpop.trf.xlu0
        %v2162 = vpop.trf.xlu0
        %v2163 = vpop.trf.xlu0
        %v2164 = vpop.trf.xlu0
        %v2165 = vpop.trf.xlu0
        %v2166 = vpop.trf.xlu0
        %v2167 = vpop.trf.xlu0
        %v2169 = vsel %vm2054, %v2152, 0
        %v2172 = vsel %vm2054, %v2153, 0
        %2174 = vmatprep.subr.mxu0 0.0
        %2175 = vmatpush1.msra.mxu0 %v1929
        %2176 = vmatprep.subr.mxu0 0.0
        %2177 = vmatpush1.msra.mxu0 %v1934
        %2178 = vmatprep.subr.mxu0 0.0
        %2179 = vmatpush1.msra.mxu0 0.0
        %2180 = vmatprep.subr.mxu0 0.0
        %2181 = vmatpush1.msra.mxu0 0.0
        %2182 = vmatprep.subr.mxu0 0.0
        %2183 = vmatpush1.msra.mxu0 0.0
        %2184 = vmatprep.subr.mxu0 0.0
        %2185 = vmatpush1.msra.mxu0 0.0
        %2186 = vmatprep.subr.mxu0 0.0
        %2187 = vmatpush1.msra.mxu0 0.0
        %2188 = vmatprep.subr.mxu0 0.0
        %2189 = vmatpush1.msra.mxu0 0.0
        %2190 = vmatprep.subr.mxu0 0.0
        %2191 = vmatpush1.msra.mxu0 0.0
        %2192 = vmatprep.subr.mxu0 0.0
        %2193 = vmatpush1.msra.mxu0 0.0
        %2194 = vmatprep.subr.mxu0 0.0
        %2195 = vmatpush1.msra.mxu0 0.0
        %2196 = vmatprep.subr.mxu0 0.0
        %2197 = vmatpush1.msra.mxu0 0.0
        %2198 = vmatprep.subr.mxu0 0.0
        %2199 = vmatpush1.msra.mxu0 0.0
        %2200 = vmatprep.subr.mxu0 0.0
        %2201 = vmatpush1.msra.mxu0 0.0
        %2202 = vmatprep.subr.mxu0 0.0
        %2203 = vmatpush1.msra.mxu0 0.0
        %2204 = vmatprep.subr.mxu0 0.0
        %2205 = vmatpush1.msra.mxu0 0.0
        %2206 = vmatprep.subr.mxu0 0.0
        %2207 = vmatpush1.msra.mxu0 0.0
        %2208 = vmatprep.subr.mxu0 0.0
        %2209 = vmatpush1.msra.mxu0 0.0
        %2210 = vmatprep.subr.mxu0 0.0
        %2211 = vmatpush1.msra.mxu0 0.0
        %2212 = vmatprep.subr.mxu0 0.0
        %2213 = vmatpush1.msra.mxu0 0.0
        %2214 = vmatprep.subr.mxu0 0.0
        %2215 = vmatpush1.msra.mxu0 0.0
        %2216 = vmatprep.subr.mxu0 0.0
        %2217 = vmatpush1.msra.mxu0 0.0
        %2218 = vmatprep.subr.mxu0 0.0
        %2219 = vmatpush1.msra.mxu0 0.0
        %2220 = vmatprep.subr.mxu0 0.0
        %2221 = vmatpush1.msra.mxu0 0.0
        %2222 = vmatprep.subr.mxu0 0.0
        %2223 = vmatpush1.msra.mxu0 0.0
        %2224 = vmatprep.subr.mxu0 0.0
        %2225 = vmatpush1.msra.mxu0 0.0
        %2226 = vmatprep.subr.mxu0 0.0
        %2227 = vmatpush1.msra.mxu0 0.0
        %2228 = vmatprep.subr.mxu0 0.0
        %2229 = vmatpush1.msra.mxu0 0.0
        %2230 = vmatprep.subr.mxu0 0.0
        %2231 = vmatpush1.msra.mxu0 0.0
        %2232 = vmatprep.subr.mxu0 0.0
        %2233 = vmatpush1.msra.mxu0 0.0
        %2234 = vmatprep.subr.mxu0 0.0
        %2235 = vmatpush1.msra.mxu0 0.0
        %2236 = vmatprep.subr.mxu0 0.0
        %2237 = vmatpush1.msra.mxu0 0.0
        %2238 = vmatprep.mubr.f32.mxu0 0.0
        %2239 = vmatmul.mubr.f32.gmra.mrb[0].mxu0 %v2169
        %v2240 = vpop.f32.mrb[0].mxu0
        %v2241 = vadd.f32 %v2128, %v2240
        %v2242 = vpop.f32.mrb[0].mxu0
        %2243 = vmatprep.mubr.f32.mxu0 0.0
        %2244 = vmatmul.mubr.f32.gmra.mrb[0].mxu0 %v2172
        %v2245 = vpop.f32.mrb[0].mxu0
        %v2246 = vadd.f32 %v2133, %v2245
        %v2247 = vpop.f32.mrb[0].mxu0
        %2248 = vdwg.mxu0
        %v2249 = vadd.f32 %v2016, %v2241
        %v2250 = vadd.f32 %v2017, %v2246
        %2251 = vst.msk [vmem:[#allocation2] sm:$0xff] %vm2054, %v2249
        %2252 = vst.msk [vmem:[#allocation2 + $0x8] sm:$0xff] %vm2054, %v2250
        %p2253 = scmp.eq.s32.totalorder %s29, 1
        // Predicated region
        $region57: #{tpu_custom_call.1} parent=47 // pred_check
          %p2254 = pneg %p2253
        $region58: #{tpu_custom_call.1} parent=47 // pred_check_branch
          %2256 = sbr.rel (%p2254) target = $region60
        $region59: #{tpu_custom_call.1} parent=47 // pred_region
          %v2257 = vld [vmem:[#allocation2] sm:$0xff]
          %v2258 = vld [vmem:[#allocation2 + $0x8] sm:$0xff]
          %2260 = vrot.lane.b32.xlu0 %v2258, 16
          %v2261 = vpop.permute.xlu0 %2260
          %v2263 = vsel %vm2054, %v2257, %v2261
          %2264 = vst.msk [vmem:[%s370] sm:$0xff] %vm650, %v2263
        $region60: #{tpu_custom_call.1} parent=47 // pred_fallthru
          _
        %s2265 = sand.u32 %s216, 1
        %s2266 = scalar_lea.sflag [#allocation5], %s2265
        %s2267 = sand.u32 %s216, 1
        %s2268 = smul.addr %s2267, 8
        %s2269 = scalar_lea.vmem [#allocation6], %s2268
        // Predicated region
        $region61: #{tpu_custom_call.1} parent=47 // pred_check
          %p2270 = pneg %p226
        $region62: #{tpu_custom_call.1} parent=47 // pred_check_branch
          %2272 = sbr.rel (%p2270) target = $region64
        $region63: #{tpu_custom_call.1} parent=47 // pred_region
          %s2274 = ssub.s32 128, 128
          %2275 = vsyncadd %s2266, %s2274
          %s2276 = smul.addr %s28, 128
          %s2277 = scalar_lea.hbm %s7, %s2276
          %s2279 = sshll.u32 %s2269, 4
          %s2280 = int_to_ptr.vmem [resolvable:$true] %s2279
          %2282 = dma.vmem_to_hbm [thread:$0]  %s2280, 128, %s2277, %s2266
        $region64: #{tpu_custom_call.1} parent=47 // pred_fallthru
          _
      $region48: #{tpu_custom_call.1} parent=5 // pred_fallthru
        _
      %p2283 = scmp.le.s32.totalorder 2, %s19
      // Predicated region
      $region65: #{tpu_custom_call.1} parent=5 // pred_check
        %p2284 = pneg %p2283
      $region66: #{tpu_custom_call.1} parent=5 // pred_check_branch
        %2286 = sbr.rel (%p2284) target = $region68
      $region67: #{tpu_custom_call.1} parent=5 // pred_region
        %s2287 = ssub.s32 %s19, 2
        // Predicated region
        $region69: #{tpu_custom_call.1} parent=67 // pred_check
          %p2288 = pneg %p232
        $region70: #{tpu_custom_call.1} parent=67 // pred_check_branch
          %2290 = sbr.rel (%p2288) target = $region72
        $region71: #{tpu_custom_call.1} parent=67 // pred_region
          %s2291 = sand.u32 %s217, 1
          %s2292 = scalar_lea.sflag [#allocation5], %s2291
          %s2293 = sand.u32 %s217, 1
          %s2294 = smul.addr %s2293, 8
          %s2295 = scalar_lea.vmem [#allocation6], %s2294
          %2296 = dma.done %s2292, 128
        $region72: #{tpu_custom_call.1} parent=67 // pred_fallthru
          _
      $region68: #{tpu_custom_call.1} parent=5 // pred_fallthru
        _
    $region6: #{tpu_custom_call.1} parent=1 // loop_footer
      %s23 = sadd.s32 1, %s19
    $region7: #{tpu_custom_call.1} parent=1 // loop_footer_branch
      %18 = sbr.rel target = $region3
    $region8: #{tpu_custom_call.1} parent=1 // loop_exit
      _
    %2297 = vsyncpa [#allocation4], 1
    %s2298 = scalar_lea.sflag [#allocation4], 1
    %2299 = vsyncpa %s2298, 1
    %2300 = vsyncpa [#allocation5], 1
    %s2301 = scalar_lea.sflag [#allocation5], 1
    %2302 = vsyncpa %s2301, 1

</llo_original>
